<compile_context>
chip_gen: v7x
topology: tpu7x:2x2x1
jax: 0.10.0
libtpu: 0.0.40
codegen_flags: <defaults>
</compile_context>

<pallas_src>
import functools

import jax
import jax.numpy as jnp
from jax.experimental import pallas as pl
from jax.experimental.pallas import tpu as pltpu

_SUBLANE = 8  # f32 sublanes per vreg


def _round_up(n, m):
    return ((n + m - 1) // m) * m


def _mlp_kernel(x_ref,
                w0_ref, b0_ref,
                w1_ref, b1_ref,
                w2_ref, b2_ref,
                w3_ref, b3_ref,
                w4_ref, b4_ref,
                out_ref, *, act_dtype):
    """Fused 5-layer MLP on one batch tile.

    Dots run on the MXU in the weights' dtype (bf16 by default) with f32 accumulation;
    bias add + tanh run in `act_dtype` (f32 default: safe on v5e which has no bf16
    VPU/EUP; pass bf16 on v6e/v7x to halve VPU/EUP work). Dropout is identity.
    """

    def layer(h, w_ref, b_ref, activate):
        acc = jnp.dot(h.astype(w_ref.dtype), w_ref[...],
                      preferred_element_type=jnp.float32)
        acc = (acc + b_ref[...]).astype(act_dtype)
        return jnp.tanh(acc) if activate else acc

    h = x_ref[...]
    h = layer(h, w0_ref, b0_ref, True)   # + identity dropout
    h = layer(h, w1_ref, b1_ref, True)   # + identity dropout
    h = layer(h, w2_ref, b2_ref, True)   # + identity dropout
    h = layer(h, w3_ref, b3_ref, True)
    out = layer(h, w4_ref, b4_ref, False)

    out_ref[...] = out.astype(out_ref.dtype)


def fully_connected_network(x, params, *, batch_tile=512,
                            param_dtype=jnp.bfloat16,
                            act_dtype=jnp.float32):
    """x: [B, D_in] float32. params: list of 5 (W [fan_in, fan_out], b [fan_out])."""
    assert len(params) == 5
    B, d_in = x.shape
    dims = [d_in] + [w.shape[1] for (w, _) in params]
    d_out = dims[-1]

    # ---- Flatten params: weights in the MXU dtype, biases f32 for the epilogue ----
    flat_params = []
    for (w, b) in params:
        flat_params.append(w.astype(param_dtype))
        flat_params.append(b.reshape(1, -1).astype(jnp.float32))

    # ---- Batch tiling: no host-side padding; partial last tile is clipped ---------
    b_al = _round_up(B, _SUBLANE)
    # Keep >= 2 grid steps when the batch allows it so v7x megacore can shard the
    # batch axis across both TensorCores; harmless on v5e/v6e.
    cap = max(_SUBLANE, _round_up(-(-b_al // 2), _SUBLANE))
    batch_tile = max(_SUBLANE, min(batch_tile, cap))
    batch_tile = _round_up(batch_tile, _SUBLANE)
    n_tiles = pl.cdiv(B, batch_tile)

    # ---- BlockSpecs: x/out stream over the batch grid, params stay VMEM-resident --
    # (constant index_map -> single DMA, reused every grid step)
    in_specs = [pl.BlockSpec((batch_tile, d_in), lambda i: (i, 0))]
    for p in flat_params:
        in_specs.append(pl.BlockSpec(p.shape, lambda i: (0, 0)))

    out_specs = pl.BlockSpec((batch_tile, d_out), lambda i: (i, 0))
    out_shape = jax.ShapeDtypeStruct((B, d_out), jnp.float32)

    # ---- Cost hint from true (unpadded) dims ---------------------------------------
    flops = 2 * B * sum(a * b for a, b in zip(dims[:-1], dims[1:]))
    transcendentals = B * sum(dims[1:-1])        # 4 tanh layers
    bytes_accessed = (int(x.size) * x.dtype.itemsize
                      + sum(int(p.size) * p.dtype.itemsize for p in flat_params)
                      + B * d_out * 4)
    cost = pl.CostEstimate(flops=int(flops),
                           transcendentals=int(transcendentals),
                           bytes_accessed=int(bytes_accessed))

    # ---- VMEM budget: resident params (pipeline may double-buffer them) + streamed
    # x/out tiles (double-buffered) + headroom; capped below v7x's 64 MiB physical. ---
    resident = sum(int(p.size) * p.dtype.itemsize for p in flat_params)
    tile_bytes = batch_tile * (d_in * x.dtype.itemsize + d_out * 4)
    budget = 2 * (resident + tile_bytes) + (8 << 20)
    vmem_limit = int(min(60 << 20, max(32 << 20, budget)))

    kernel = functools.partial(_mlp_kernel, act_dtype=act_dtype)

    out = pl.pallas_call(
        kernel,
        grid=(n_tiles,),
        in_specs=in_specs,
        out_specs=out_specs,
        out_shape=out_shape,
        compiler_params=pltpu.CompilerParams(
            dimension_semantics=("parallel",),   # independent batch tiles
            vmem_limit_bytes=vmem_limit,
        ),
        cost_estimate=cost,
    )(x, *flat_params)

    return out


def init_params(key, input_dim, num_hidden_neurons):
    """nn.Linear-style init (uniform +/- 1/sqrt(fan_in)); W is [fan_in, fan_out]."""
    dims = [input_dim] + list(num_hidden_neurons)
    params = []
    for i in range(len(dims) - 1):
        fan_in, fan_out = dims[i], dims[i + 1]
        key, kw, kb = jax.random.split(key, 3)
        bound = 1.0 / jnp.sqrt(fan_in)
        w = jax.random.uniform(kw, (fan_in, fan_out), jnp.float32, -bound, bound)
        b = jax.random.uniform(kb, (fan_out,), jnp.float32, -bound, bound)
        params.append((w, b))
    return params


def reference_forward(x, params):
    """Pure-JAX reference (dropout = identity in eval mode)."""
    h = x
    for i, (w, b) in enumerate(params):
        h = h @ w + b
        if i < len(params) - 1:
            h = jnp.tanh(h)
    return h


if __name__ == "__main__":
    key = jax.random.PRNGKey(0)

    batch = 256                       # capped to batch_tile=128 -> 2 grid steps
    input_dim = 16
    num_hidden_neurons = (32, 32, 32, 32, 8)
    dropout_rte = 0.1                 # inference mode -> identity

    key, kx = jax.random.split(key)
    x = jax.random.normal(kx, (batch, input_dim), jnp.float32)
    params = init_params(key, input_dim, num_hidden_neurons)

    ref = reference_forward(x, params)

    # f32 MXU path: exact parity with the reference.
    out_f32 = jax.block_until_ready(
        fully_connected_network(x, params, param_dtype=jnp.float32))
    assert out_f32.shape == (batch, num_hidden_neurons[-1]), out_f32.shape
    assert jnp.allclose(out_f32, ref, atol=1e-4, rtol=1e-4), (
        f"f32 max abs err = {jnp.max(jnp.abs(out_f32 - ref))}")

    # Default bf16 MXU path (f32 accumulation + f32 epilogue).
    out_bf16 = jax.block_until_ready(fully_connected_network(x, params))
    assert out_bf16.shape == (batch, num_hidden_neurons[-1]), out_bf16.shape
    assert jnp.allclose(out_bf16, ref, atol=1e-1, rtol=1e-1), (
        f"bf16 max abs err = {jnp.max(jnp.abs(out_bf16 - ref))}")

    # Ragged batch (not a multiple of the tile): exercises the no-pad partial-tile path.
    xr = x[:200]
    ref_r = reference_forward(xr, params)
    out_r = jax.block_until_ready(
        fully_connected_network(xr, params, param_dtype=jnp.float32))
    assert out_r.shape == (200, num_hidden_neurons[-1]), out_r.shape
    assert jnp.allclose(out_r, ref_r, atol=1e-4, rtol=1e-4), (
        f"ragged max abs err = {jnp.max(jnp.abs(out_r - ref_r))}")

    print("KERNEL_OK")
</pallas_src>

<mosaic_0001>
module attributes {stable_mosaic.version = 11 : i64} {
  func.func @_mlp_kernel(%arg0: i32, %arg1: memref<128x16xf32, #tpu.memory_space<vmem>>, %arg2: memref<16x32xf32, #tpu.memory_space<vmem>>, %arg3: memref<1x32xf32, #tpu.memory_space<vmem>>, %arg4: memref<32x32xf32, #tpu.memory_space<vmem>>, %arg5: memref<1x32xf32, #tpu.memory_space<vmem>>, %arg6: memref<32x32xf32, #tpu.memory_space<vmem>>, %arg7: memref<1x32xf32, #tpu.memory_space<vmem>>, %arg8: memref<32x32xf32, #tpu.memory_space<vmem>>, %arg9: memref<1x32xf32, #tpu.memory_space<vmem>>, %arg10: memref<32x8xf32, #tpu.memory_space<vmem>>, %arg11: memref<1x8xf32, #tpu.memory_space<vmem>>, %arg12: memref<128x8xf32, #tpu.memory_space<vmem>>) attributes {dimension_semantics = [#tpu.dimension_semantics<parallel>], iteration_bounds = array<i64: 2>, scalar_prefetch = 0 : i64, scratch_operands = 0 : i64, tpu.core_type = #tpu.core_type<tc>, window_params = [{transform_indices = @transform_0, window_bounds = array<i64: 128, 16>}, {pipeline_mode = #tpu.pipeline_mode<synchronous>, transform_indices = @transform_1, window_bounds = array<i64: 16, 32>}, {pipeline_mode = #tpu.pipeline_mode<synchronous>, transform_indices = @transform_2, window_bounds = array<i64: 1, 32>}, {pipeline_mode = #tpu.pipeline_mode<synchronous>, transform_indices = @transform_3, window_bounds = array<i64: 32, 32>}, {pipeline_mode = #tpu.pipeline_mode<synchronous>, transform_indices = @transform_4, window_bounds = array<i64: 1, 32>}, {pipeline_mode = #tpu.pipeline_mode<synchronous>, transform_indices = @transform_5, window_bounds = array<i64: 32, 32>}, {pipeline_mode = #tpu.pipeline_mode<synchronous>, transform_indices = @transform_6, window_bounds = array<i64: 1, 32>}, {pipeline_mode = #tpu.pipeline_mode<synchronous>, transform_indices = @transform_7, window_bounds = array<i64: 32, 32>}, {pipeline_mode = #tpu.pipeline_mode<synchronous>, transform_indices = @transform_8, window_bounds = array<i64: 1, 32>}, {pipeline_mode = #tpu.pipeline_mode<synchronous>, transform_indices = @transform_9, window_bounds = array<i64: 32, 8>}, {pipeline_mode = #tpu.pipeline_mode<synchronous>, transform_indices = @transform_10, window_bounds = array<i64: 1, 8>}, {transform_indices = @transform_11, window_bounds = array<i64: 128, 8>}]} {
    %c0 = arith.constant 0 : index
    %c0_0 = arith.constant 0 : index
    %0 = vector.load %arg1[%c0, %c0_0] : memref<128x16xf32, #tpu.memory_space<vmem>>, vector<128x16xf32>
    %c0_1 = arith.constant 0 : index
    %c0_2 = arith.constant 0 : index
    %1 = vector.load %arg2[%c0_1, %c0_2] : memref<16x32xf32, #tpu.memory_space<vmem>>, vector<16x32xf32>
    %cst = arith.constant dense<0.000000e+00> : vector<128x32xf32>
    %2 = tpu.matmul %0, %1, %cst {dimension_numbers = #tpu.dot_dimension_numbers<[1], [0], [0], [1], [0, 0, 1, 1], [], []>} : vector<128x16xf32>, vector<16x32xf32>, vector<128x32xf32> -> vector<128x32xf32>
    %c0_3 = arith.constant 0 : index
    %c0_4 = arith.constant 0 : index
    %3 = vector.load %arg3[%c0_3, %c0_4] : memref<1x32xf32, #tpu.memory_space<vmem>>, vector<1x32xf32>
    %4 = vector.broadcast %3 : vector<1x32xf32> to vector<128x32xf32>
    %5 = arith.addf %2, %4 : vector<128x32xf32>
    %6 = math.tanh %5 : vector<128x32xf32>
    %c0_5 = arith.constant 0 : index
    %c0_6 = arith.constant 0 : index
    %7 = vector.load %arg4[%c0_5, %c0_6] : memref<32x32xf32, #tpu.memory_space<vmem>>, vector<32x32xf32>
    %cst_7 = arith.constant dense<0.000000e+00> : vector<128x32xf32>
    %8 = tpu.matmul %6, %7, %cst_7 {dimension_numbers = #tpu.dot_dimension_numbers<[1], [0], [0], [1], [0, 0, 1, 1], [], []>} : vector<128x32xf32>, vector<32x32xf32>, vector<128x32xf32> -> vector<128x32xf32>
    %c0_8 = arith.constant 0 : index
    %c0_9 = arith.constant 0 : index
    %9 = vector.load %arg5[%c0_8, %c0_9] : memref<1x32xf32, #tpu.memory_space<vmem>>, vector<1x32xf32>
    %10 = vector.broadcast %9 : vector<1x32xf32> to vector<128x32xf32>
    %11 = arith.addf %8, %10 : vector<128x32xf32>
    %12 = math.tanh %11 : vector<128x32xf32>
    %c0_10 = arith.constant 0 : index
    %c0_11 = arith.constant 0 : index
    %13 = vector.load %arg6[%c0_10, %c0_11] : memref<32x32xf32, #tpu.memory_space<vmem>>, vector<32x32xf32>
    %cst_12 = arith.constant dense<0.000000e+00> : vector<128x32xf32>
    %14 = tpu.matmul %12, %13, %cst_12 {dimension_numbers = #tpu.dot_dimension_numbers<[1], [0], [0], [1], [0, 0, 1, 1], [], []>} : vector<128x32xf32>, vector<32x32xf32>, vector<128x32xf32> -> vector<128x32xf32>
    %c0_13 = arith.constant 0 : index
    %c0_14 = arith.constant 0 : index
    %15 = vector.load %arg7[%c0_13, %c0_14] : memref<1x32xf32, #tpu.memory_space<vmem>>, vector<1x32xf32>
    %16 = vector.broadcast %15 : vector<1x32xf32> to vector<128x32xf32>
    %17 = arith.addf %14, %16 : vector<128x32xf32>
    %18 = math.tanh %17 : vector<128x32xf32>
    %c0_15 = arith.constant 0 : index
    %c0_16 = arith.constant 0 : index
    %19 = vector.load %arg8[%c0_15, %c0_16] : memref<32x32xf32, #tpu.memory_space<vmem>>, vector<32x32xf32>
    %cst_17 = arith.constant dense<0.000000e+00> : vector<128x32xf32>
    %20 = tpu.matmul %18, %19, %cst_17 {dimension_numbers = #tpu.dot_dimension_numbers<[1], [0], [0], [1], [0, 0, 1, 1], [], []>} : vector<128x32xf32>, vector<32x32xf32>, vector<128x32xf32> -> vector<128x32xf32>
    %c0_18 = arith.constant 0 : index
    %c0_19 = arith.constant 0 : index
    %21 = vector.load %arg9[%c0_18, %c0_19] : memref<1x32xf32, #tpu.memory_space<vmem>>, vector<1x32xf32>
    %22 = vector.broadcast %21 : vector<1x32xf32> to vector<128x32xf32>
    %23 = arith.addf %20, %22 : vector<128x32xf32>
    %24 = math.tanh %23 : vector<128x32xf32>
    %c0_20 = arith.constant 0 : index
    %c0_21 = arith.constant 0 : index
    %25 = vector.load %arg10[%c0_20, %c0_21] : memref<32x8xf32, #tpu.memory_space<vmem>>, vector<32x8xf32>
    %cst_22 = arith.constant dense<0.000000e+00> : vector<128x8xf32>
    %26 = tpu.matmul %24, %25, %cst_22 {dimension_numbers = #tpu.dot_dimension_numbers<[1], [0], [0], [1], [0, 0, 1, 1], [], []>} : vector<128x32xf32>, vector<32x8xf32>, vector<128x8xf32> -> vector<128x8xf32>
    %c0_23 = arith.constant 0 : index
    %c0_24 = arith.constant 0 : index
    %27 = vector.load %arg11[%c0_23, %c0_24] : memref<1x8xf32, #tpu.memory_space<vmem>>, vector<1x8xf32>
    %28 = vector.broadcast %27 : vector<1x8xf32> to vector<128x8xf32>
    %29 = arith.addf %26, %28 : vector<128x8xf32>
    %c0_25 = arith.constant 0 : index
    %c0_26 = arith.constant 0 : index
    %30 = vector.load %arg12[%c0_25, %c0_26] : memref<128x8xf32, #tpu.memory_space<vmem>>, vector<128x8xf32>
    tpu.vector_store %arg12[%c0_25, %c0_26], %29 {strides = array<i32>} : memref<128x8xf32, #tpu.memory_space<vmem>>, vector<128x8xf32>,
    return
  }
  func.func @transform_0(%arg0: i32) -> (i32, i32) {
    %c0_i32 = arith.constant 0 : i32
    %c0_i32_0 = arith.constant 0 : i32
    return %arg0, %c0_i32 : i32, i32
  }
  func.func @transform_1(%arg0: i32) -> (i32, i32) {
    %c0_i32 = arith.constant 0 : i32
    %c0_i32_0 = arith.constant 0 : i32
    %c0_i32_1 = arith.constant 0 : i32
    return %c0_i32, %c0_i32_0 : i32, i32
  }
  func.func @transform_2(%arg0: i32) -> (i32, i32) {
    %c0_i32 = arith.constant 0 : i32
    %c0_i32_0 = arith.constant 0 : i32
    %c0_i32_1 = arith.constant 0 : i32
    return %c0_i32, %c0_i32_0 : i32, i32
  }
  func.func @transform_3(%arg0: i32) -> (i32, i32) {
    %c0_i32 = arith.constant 0 : i32
    %c0_i32_0 = arith.constant 0 : i32
    %c0_i32_1 = arith.constant 0 : i32
    return %c0_i32, %c0_i32_0 : i32, i32
  }
  func.func @transform_4(%arg0: i32) -> (i32, i32) {
    %c0_i32 = arith.constant 0 : i32
    %c0_i32_0 = arith.constant 0 : i32
    %c0_i32_1 = arith.constant 0 : i32
    return %c0_i32, %c0_i32_0 : i32, i32
  }
  func.func @transform_5(%arg0: i32) -> (i32, i32) {
    %c0_i32 = arith.constant 0 : i32
    %c0_i32_0 = arith.constant 0 : i32
    %c0_i32_1 = arith.constant 0 : i32
    return %c0_i32, %c0_i32_0 : i32, i32
  }
  func.func @transform_6(%arg0: i32) -> (i32, i32) {
    %c0_i32 = arith.constant 0 : i32
    %c0_i32_0 = arith.constant 0 : i32
    %c0_i32_1 = arith.constant 0 : i32
    return %c0_i32, %c0_i32_0 : i32, i32
  }
  func.func @transform_7(%arg0: i32) -> (i32, i32) {
    %c0_i32 = arith.constant 0 : i32
    %c0_i32_0 = arith.constant 0 : i32
    %c0_i32_1 = arith.constant 0 : i32
    return %c0_i32, %c0_i32_0 : i32, i32
  }
  func.func @transform_8(%arg0: i32) -> (i32, i32) {
    %c0_i32 = arith.constant 0 : i32
    %c0_i32_0 = arith.constant 0 : i32
    %c0_i32_1 = arith.constant 0 : i32
    return %c0_i32, %c0_i32_0 : i32, i32
  }
  func.func @transform_9(%arg0: i32) -> (i32, i32) {
    %c0_i32 = arith.constant 0 : i32
    %c0_i32_0 = arith.constant 0 : i32
    %c0_i32_1 = arith.constant 0 : i32
    return %c0_i32, %c0_i32_0 : i32, i32
  }
  func.func @transform_10(%arg0: i32) -> (i32, i32) {
    %c0_i32 = arith.constant 0 : i32
    %c0_i32_0 = arith.constant 0 : i32
    %c0_i32_1 = arith.constant 0 : i32
    return %c0_i32, %c0_i32_0 : i32, i32
  }
  func.func @transform_11(%arg0: i32) -> (i32, i32) {
    %c0_i32 = arith.constant 0 : i32
    %c0_i32_0 = arith.constant 0 : i32
    return %arg0, %c0_i32 : i32, i32
  }
}

</mosaic_0001>

<llo_original>
// kernel: tpu_custom_call.1
$region0: #{tpu_custom_call.1}
  #allocation0 [shape = 'u32[]', space=smem, size = 0x4, offset = 0x4, fixed_abs, tag = 'smem constant byte address 0x4 - core index']
  #allocation1 [shape = 'u32[144,128]{1,0:T(1,128)}', space=vmem, size = 0x12000, scoped, tag = 'internal scratch']
  %s0 = inlined_call_operand.vmem [shape: f32[256,16], index: 0, kind: input, shape index: {}]
  %s1 = inlined_call_operand.vmem [shape: f32[16,32], index: 1, kind: input, shape index: {}]
  %s2 = inlined_call_operand.vmem [shape: f32[1,32], index: 2, kind: input, shape index: {}]
  %s3 = inlined_call_operand.vmem [shape: f32[32,32], index: 3, kind: input, shape index: {}]
  %s4 = inlined_call_operand.vmem [shape: f32[1,32], index: 4, kind: input, shape index: {}]
  %s5 = inlined_call_operand.vmem [shape: f32[32,32], index: 5, kind: input, shape index: {}]
  %s6 = inlined_call_operand.vmem [shape: f32[1,32], index: 6, kind: input, shape index: {}]
  %s7 = inlined_call_operand.vmem [shape: f32[32,32], index: 7, kind: input, shape index: {}]
  %s8 = inlined_call_operand.vmem [shape: f32[1,32], index: 8, kind: input, shape index: {}]
  %s9 = inlined_call_operand.vmem [shape: f32[32,8], index: 9, kind: input, shape index: {}]
  %s10 = inlined_call_operand.vmem [shape: f32[1,8], index: 10, kind: input, shape index: {}]
  %s11 = inlined_call_operand.vmem [shape: f32[256,8], index: 11, kind: output, shape index: {}]
  %s12 = sld [smem:[#allocation0]]
  $region77: #{tpu_custom_call.1} parent=0
    _
  %s14 = ssub.s32 1, %s12
  %s15 = scalar_select 0, %s14, %s12
  loop: start=0, step=1, limit=4
  $region2: #{tpu_custom_call.1} parent=0 // loop_pre_header
    _
  $region3: #{tpu_custom_call.1} parent=0 // loop_header
    %s17 = sphi 0, %s21
    %p18 = scmp.ge.s32.totalorder %s17, 4
    %s27 = sphi 0, %s29
    %s30 = sphi 0, %s27
    %s31 = sphi 0, %s30
    %s47 = sphi 0, %s31
    %s51 = sphi 0, %s51
    %s53 = sphi 0, %s51
    %s54 = sphi 0, %s53
    %s68 = sphi 0, %s54
    %s72 = sphi 0, %s72
    %s74 = sphi 0, %s72
    %s75 = sphi 0, %s74
    %s89 = sphi 0, %s75
    %s93 = sphi 0, %s93
    %s95 = sphi 0, %s93
    %s96 = sphi 0, %s95
    %s110 = sphi 0, %s96
    %s114 = sphi 0, %s114
    %s116 = sphi 0, %s114
    %s117 = sphi 0, %s116
    %s131 = sphi 0, %s117
    %s135 = sphi 0, %s135
    %s137 = sphi 0, %s135
    %s138 = sphi 0, %s137
    %s152 = sphi 0, %s138
    %s156 = sphi 0, %s156
    %s158 = sphi 0, %s156
    %s159 = sphi 0, %s158
    %s173 = sphi 0, %s159
    %s177 = sphi 0, %s177
    %s179 = sphi 0, %s177
    %s180 = sphi 0, %s179
    %s194 = sphi 0, %s180
    %s198 = sphi 0, %s198
    %s200 = sphi 0, %s198
    %s201 = sphi 0, %s200
    %s215 = sphi 0, %s201
    %s219 = sphi 0, %s219
    %s221 = sphi 0, %s219
    %s222 = sphi 0, %s221
    %s236 = sphi 0, %s222
    %s240 = sphi 0, %s240
    %s242 = sphi 0, %s240
    %s243 = sphi 0, %s242
    %s257 = sphi 0, %s243
    %s263 = sphi 0, %s265
    %s266 = sphi 0, %s263
    %s267 = sphi 0, %s266
    %s283 = sphi 0, %s267
  $region4: #{tpu_custom_call.1} parent=0 // loop_header_branch
    %20 = sbr.rel (%p18) target = $region8
  $region5: #{tpu_custom_call.1} parent=0 // loop_body
    %s22 = ssub.s32 %s17, 1
    %s23 = ssub.s32 %s17, 2
    %s24 = sadd.s32 %s17, 1
    %s25 = ssub.s32 %s17, %s24
    %p26 = scmp.eq.s32.totalorder %s25, 0
    %s28 = sadd.s32 %s27, 1
    %s29 = scalar_select %p26, %s27, %s28
    %p32 = pneg %p26
    %p33 = scmp.eq.s32.totalorder %s17, 1
    %p34 = por %p32, %p33
    %p35 = scmp.ne.s32.totalorder %s27, %s30
    %p36 = scmp.eq.s32.totalorder %s17, 0
    %p37 = por %p35, %p36
    %p38 = scmp.ne.s32.totalorder %s27, %s30
    %p39 = scmp.eq.s32.totalorder %s22, 1
    %p40 = por %p38, %p39
    %p41 = scmp.ne.s32.totalorder %s30, %s31
    %p42 = scmp.eq.s32.totalorder %s22, 0
    %p43 = por %p41, %p42
    %p44 = scmp.ne.s32.totalorder %s30, %s31
    %p45 = scmp.eq.s32.totalorder %s23, 1
    %p46 = por %p44, %p45
    %p48 = scmp.ne.s32.totalorder %s31, %s47
    %p49 = scmp.eq.s32.totalorder %s23, 0
    %p50 = por %p48, %p49
    %s52 = sadd.s32 %s51, 1
    %p55 = scmp.eq.s32.totalorder %s17, 1
    %p56 = scmp.ne.s32.totalorder %s51, %s53
    %p57 = scmp.eq.s32.totalorder %s17, 0
    %p58 = por %p56, %p57
    %p59 = scmp.ne.s32.totalorder %s51, %s53
    %p60 = scmp.eq.s32.totalorder %s22, 1
    %p61 = por %p59, %p60
    %p62 = scmp.ne.s32.totalorder %s53, %s54
    %p63 = scmp.eq.s32.totalorder %s22, 0
    %p64 = por %p62, %p63
    %p65 = scmp.ne.s32.totalorder %s53, %s54
    %p66 = scmp.eq.s32.totalorder %s23, 1
    %p67 = por %p65, %p66
    %p69 = scmp.ne.s32.totalorder %s54, %s68
    %p70 = scmp.eq.s32.totalorder %s23, 0
    %p71 = por %p69, %p70
    %s73 = sadd.s32 %s72, 1
    %p76 = scmp.eq.s32.totalorder %s17, 1
    %p77 = scmp.ne.s32.totalorder %s72, %s74
    %p78 = scmp.eq.s32.totalorder %s17, 0
    %p79 = por %p77, %p78
    %p80 = scmp.ne.s32.totalorder %s72, %s74
    %p81 = scmp.eq.s32.totalorder %s22, 1
    %p82 = por %p80, %p81
    %p83 = scmp.ne.s32.totalorder %s74, %s75
    %p84 = scmp.eq.s32.totalorder %s22, 0
    %p85 = por %p83, %p84
    %p86 = scmp.ne.s32.totalorder %s74, %s75
    %p87 = scmp.eq.s32.totalorder %s23, 1
    %p88 = por %p86, %p87
    %p90 = scmp.ne.s32.totalorder %s75, %s89
    %p91 = scmp.eq.s32.totalorder %s23, 0
    %p92 = por %p90, %p91
    %s94 = sadd.s32 %s93, 1
    %p97 = scmp.eq.s32.totalorder %s17, 1
    %p98 = scmp.ne.s32.totalorder %s93, %s95
    %p99 = scmp.eq.s32.totalorder %s17, 0
    %p100 = por %p98, %p99
    %p101 = scmp.ne.s32.totalorder %s93, %s95
    %p102 = scmp.eq.s32.totalorder %s22, 1
    %p103 = por %p101, %p102
    %p104 = scmp.ne.s32.totalorder %s95, %s96
    %p105 = scmp.eq.s32.totalorder %s22, 0
    %p106 = por %p104, %p105
    %p107 = scmp.ne.s32.totalorder %s95, %s96
    %p108 = scmp.eq.s32.totalorder %s23, 1
    %p109 = por %p107, %p108
    %p111 = scmp.ne.s32.totalorder %s96, %s110
    %p112 = scmp.eq.s32.totalorder %s23, 0
    %p113 = por %p111, %p112
    %s115 = sadd.s32 %s114, 1
    %p118 = scmp.eq.s32.totalorder %s17, 1
    %p119 = scmp.ne.s32.totalorder %s114, %s116
    %p120 = scmp.eq.s32.totalorder %s17, 0
    %p121 = por %p119, %p120
    %p122 = scmp.ne.s32.totalorder %s114, %s116
    %p123 = scmp.eq.s32.totalorder %s22, 1
    %p124 = por %p122, %p123
    %p125 = scmp.ne.s32.totalorder %s116, %s117
    %p126 = scmp.eq.s32.totalorder %s22, 0
    %p127 = por %p125, %p126
    %p128 = scmp.ne.s32.totalorder %s116, %s117
    %p129 = scmp.eq.s32.totalorder %s23, 1
    %p130 = por %p128, %p129
    %p132 = scmp.ne.s32.totalorder %s117, %s131
    %p133 = scmp.eq.s32.totalorder %s23, 0
    %p134 = por %p132, %p133
    %s136 = sadd.s32 %s135, 1
    %p139 = scmp.eq.s32.totalorder %s17, 1
    %p140 = scmp.ne.s32.totalorder %s135, %s137
    %p141 = scmp.eq.s32.totalorder %s17, 0
    %p142 = por %p140, %p141
    %p143 = scmp.ne.s32.totalorder %s135, %s137
    %p144 = scmp.eq.s32.totalorder %s22, 1
    %p145 = por %p143, %p144
    %p146 = scmp.ne.s32.totalorder %s137, %s138
    %p147 = scmp.eq.s32.totalorder %s22, 0
    %p148 = por %p146, %p147
    %p149 = scmp.ne.s32.totalorder %s137, %s138
    %p150 = scmp.eq.s32.totalorder %s23, 1
    %p151 = por %p149, %p150
    %p153 = scmp.ne.s32.totalorder %s138, %s152
    %p154 = scmp.eq.s32.totalorder %s23, 0
    %p155 = por %p153, %p154
    %s157 = sadd.s32 %s156, 1
    %p160 = scmp.eq.s32.totalorder %s17, 1
    %p161 = scmp.ne.s32.totalorder %s156, %s158
    %p162 = scmp.eq.s32.totalorder %s17, 0
    %p163 = por %p161, %p162
    %p164 = scmp.ne.s32.totalorder %s156, %s158
    %p165 = scmp.eq.s32.totalorder %s22, 1
    %p166 = por %p164, %p165
    %p167 = scmp.ne.s32.totalorder %s158, %s159
    %p168 = scmp.eq.s32.totalorder %s22, 0
    %p169 = por %p167, %p168
    %p170 = scmp.ne.s32.totalorder %s158, %s159
    %p171 = scmp.eq.s32.totalorder %s23, 1
    %p172 = por %p170, %p171
    %p174 = scmp.ne.s32.totalorder %s159, %s173
    %p175 = scmp.eq.s32.totalorder %s23, 0
    %p176 = por %p174, %p175
    %s178 = sadd.s32 %s177, 1
    %p181 = scmp.eq.s32.totalorder %s17, 1
    %p182 = scmp.ne.s32.totalorder %s177, %s179
    %p183 = scmp.eq.s32.totalorder %s17, 0
    %p184 = por %p182, %p183
    %p185 = scmp.ne.s32.totalorder %s177, %s179
    %p186 = scmp.eq.s32.totalorder %s22, 1
    %p187 = por %p185, %p186
    %p188 = scmp.ne.s32.totalorder %s179, %s180
    %p189 = scmp.eq.s32.totalorder %s22, 0
    %p190 = por %p188, %p189
    %p191 = scmp.ne.s32.totalorder %s179, %s180
    %p192 = scmp.eq.s32.totalorder %s23, 1
    %p193 = por %p191, %p192
    %p195 = scmp.ne.s32.totalorder %s180, %s194
    %p196 = scmp.eq.s32.totalorder %s23, 0
    %p197 = por %p195, %p196
    %s199 = sadd.s32 %s198, 1
    %p202 = scmp.eq.s32.totalorder %s17, 1
    %p203 = scmp.ne.s32.totalorder %s198, %s200
    %p204 = scmp.eq.s32.totalorder %s17, 0
    %p205 = por %p203, %p204
    %p206 = scmp.ne.s32.totalorder %s198, %s200
    %p207 = scmp.eq.s32.totalorder %s22, 1
    %p208 = por %p206, %p207
    %p209 = scmp.ne.s32.totalorder %s200, %s201
    %p210 = scmp.eq.s32.totalorder %s22, 0
    %p211 = por %p209, %p210
    %p212 = scmp.ne.s32.totalorder %s200, %s201
    %p213 = scmp.eq.s32.totalorder %s23, 1
    %p214 = por %p212, %p213
    %p216 = scmp.ne.s32.totalorder %s201, %s215
    %p217 = scmp.eq.s32.totalorder %s23, 0
    %p218 = por %p216, %p217
    %s220 = sadd.s32 %s219, 1
    %p223 = scmp.eq.s32.totalorder %s17, 1
    %p224 = scmp.ne.s32.totalorder %s219, %s221
    %p225 = scmp.eq.s32.totalorder %s17, 0
    %p226 = por %p224, %p225
    %p227 = scmp.ne.s32.totalorder %s219, %s221
    %p228 = scmp.eq.s32.totalorder %s22, 1
    %p229 = por %p227, %p228
    %p230 = scmp.ne.s32.totalorder %s221, %s222
    %p231 = scmp.eq.s32.totalorder %s22, 0
    %p232 = por %p230, %p231
    %p233 = scmp.ne.s32.totalorder %s221, %s222
    %p234 = scmp.eq.s32.totalorder %s23, 1
    %p235 = por %p233, %p234
    %p237 = scmp.ne.s32.totalorder %s222, %s236
    %p238 = scmp.eq.s32.totalorder %s23, 0
    %p239 = por %p237, %p238
    %s241 = sadd.s32 %s240, 1
    %p244 = scmp.eq.s32.totalorder %s17, 1
    %p245 = scmp.ne.s32.totalorder %s240, %s242
    %p246 = scmp.eq.s32.totalorder %s17, 0
    %p247 = por %p245, %p246
    %p248 = scmp.ne.s32.totalorder %s240, %s242
    %p249 = scmp.eq.s32.totalorder %s22, 1
    %p250 = por %p248, %p249
    %p251 = scmp.ne.s32.totalorder %s242, %s243
    %p252 = scmp.eq.s32.totalorder %s22, 0
    %p253 = por %p251, %p252
    %p254 = scmp.ne.s32.totalorder %s242, %s243
    %p255 = scmp.eq.s32.totalorder %s23, 1
    %p256 = por %p254, %p255
    %p258 = scmp.ne.s32.totalorder %s243, %s257
    %p259 = scmp.eq.s32.totalorder %s23, 0
    %p260 = por %p258, %p259
    %s261 = ssub.s32 %s17, %s24
    %p262 = scmp.eq.s32.totalorder %s261, 0
    %s264 = sadd.s32 %s263, 1
    %s265 = scalar_select %p262, %s263, %s264
    %p268 = pneg %p262
    %p269 = scmp.eq.s32.totalorder %s17, 1
    %p270 = por %p268, %p269
    %p271 = scmp.ne.s32.totalorder %s263, %s266
    %p272 = scmp.eq.s32.totalorder %s17, 0
    %p273 = por %p271, %p272
    %p274 = scmp.ne.s32.totalorder %s263, %s266
    %p275 = scmp.eq.s32.totalorder %s22, 1
    %p276 = por %p274, %p275
    %p277 = scmp.ne.s32.totalorder %s266, %s267
    %p278 = scmp.eq.s32.totalorder %s22, 0
    %p279 = por %p277, %p278
    %p280 = scmp.ne.s32.totalorder %s266, %s267
    %p281 = scmp.eq.s32.totalorder %s23, 1
    %p282 = por %p280, %p281
    %p284 = scmp.ne.s32.totalorder %s267, %s283
    %p285 = scmp.eq.s32.totalorder %s23, 0
    %p286 = por %p284, %p285
    %p287 = scmp.le.s32.totalorder 1, %s17
    %p288 = scmp.lt.s32.totalorder %s17, 3
    %p289 = pnand %p287, %p288
    %p290 = pneg %p289
    // Predicated region
    $region9: #{tpu_custom_call.1} parent=5 // pred_check
      _
    $region10: #{tpu_custom_call.1} parent=5 // pred_check_branch
      %292 = sbr.rel (%p289) target = $region12
    $region11: #{tpu_custom_call.1} parent=5 // pred_region
      %s293 = ssub.s32 %s17, 1
      // Predicated region
      $region13: #{tpu_custom_call.1} parent=11 // pred_check
        %p294 = pneg %p64
      $region14: #{tpu_custom_call.1} parent=11 // pred_check_branch
        %296 = sbr.rel (%p294) target = $region16
      $region15: #{tpu_custom_call.1} parent=11 // pred_region
        _
      $region16: #{tpu_custom_call.1} parent=11 // pred_fallthru
        _
      // Predicated region
      $region17: #{tpu_custom_call.1} parent=11 // pred_check
        %p297 = pneg %p85
      $region18: #{tpu_custom_call.1} parent=11 // pred_check_branch
        %299 = sbr.rel (%p297) target = $region20
      $region19: #{tpu_custom_call.1} parent=11 // pred_region
        _
      $region20: #{tpu_custom_call.1} parent=11 // pred_fallthru
        _
      // Predicated region
      $region21: #{tpu_custom_call.1} parent=11 // pred_check
        %p300 = pneg %p106
      $region22: #{tpu_custom_call.1} parent=11 // pred_check_branch
        %302 = sbr.rel (%p300) target = $region24
      $region23: #{tpu_custom_call.1} parent=11 // pred_region
        _
      $region24: #{tpu_custom_call.1} parent=11 // pred_fallthru
        _
      // Predicated region
      $region25: #{tpu_custom_call.1} parent=11 // pred_check
        %p303 = pneg %p127
      $region26: #{tpu_custom_call.1} parent=11 // pred_check_branch
        %305 = sbr.rel (%p303) target = $region28
      $region27: #{tpu_custom_call.1} parent=11 // pred_region
        _
      $region28: #{tpu_custom_call.1} parent=11 // pred_fallthru
        _
      // Predicated region
      $region29: #{tpu_custom_call.1} parent=11 // pred_check
        %p306 = pneg %p148
      $region30: #{tpu_custom_call.1} parent=11 // pred_check_branch
        %308 = sbr.rel (%p306) target = $region32
      $region31: #{tpu_custom_call.1} parent=11 // pred_region
        _
      $region32: #{tpu_custom_call.1} parent=11 // pred_fallthru
        _
      // Predicated region
      $region33: #{tpu_custom_call.1} parent=11 // pred_check
        %p309 = pneg %p169
      $region34: #{tpu_custom_call.1} parent=11 // pred_check_branch
        %311 = sbr.rel (%p309) target = $region36
      $region35: #{tpu_custom_call.1} parent=11 // pred_region
        _
      $region36: #{tpu_custom_call.1} parent=11 // pred_fallthru
        _
      // Predicated region
      $region37: #{tpu_custom_call.1} parent=11 // pred_check
        %p312 = pneg %p190
      $region38: #{tpu_custom_call.1} parent=11 // pred_check_branch
        %314 = sbr.rel (%p312) target = $region40
      $region39: #{tpu_custom_call.1} parent=11 // pred_region
        _
      $region40: #{tpu_custom_call.1} parent=11 // pred_fallthru
        _
      // Predicated region
      $region41: #{tpu_custom_call.1} parent=11 // pred_check
        %p315 = pneg %p211
      $region42: #{tpu_custom_call.1} parent=11 // pred_check_branch
        %317 = sbr.rel (%p315) target = $region44
      $region43: #{tpu_custom_call.1} parent=11 // pred_region
        _
      $region44: #{tpu_custom_call.1} parent=11 // pred_fallthru
        _
      // Predicated region
      $region45: #{tpu_custom_call.1} parent=11 // pred_check
        %p318 = pneg %p232
      $region46: #{tpu_custom_call.1} parent=11 // pred_check_branch
        %320 = sbr.rel (%p318) target = $region48
      $region47: #{tpu_custom_call.1} parent=11 // pred_region
        _
      $region48: #{tpu_custom_call.1} parent=11 // pred_fallthru
        _
      // Predicated region
      $region49: #{tpu_custom_call.1} parent=11 // pred_check
        %p321 = pneg %p253
      $region50: #{tpu_custom_call.1} parent=11 // pred_check_branch
        %323 = sbr.rel (%p321) target = $region52
      $region51: #{tpu_custom_call.1} parent=11 // pred_region
        _
      $region52: #{tpu_custom_call.1} parent=11 // pred_fallthru
        _
    $region12: #{tpu_custom_call.1} parent=5 // pred_fallthru
      _
    %p324 = scmp.lt.s32.totalorder %s17, 2
    // Predicated region
    $region53: #{tpu_custom_call.1} parent=5 // pred_check
      %p325 = pneg %p324
    $region54: #{tpu_custom_call.1} parent=5 // pred_check_branch
      %327 = sbr.rel (%p325) target = $region56
    $region55: #{tpu_custom_call.1} parent=5 // pred_region
      // Predicated region
      $region57: #{tpu_custom_call.1} parent=55 // pred_check
        %p328 = pneg %p37
      $region58: #{tpu_custom_call.1} parent=55 // pred_check_branch
        %330 = sbr.rel (%p328) target = $region60
      $region59: #{tpu_custom_call.1} parent=55 // pred_region
        %s331 = smul.u32 16, %s17
        %p332 = scmp.lt.s32.totalorder %s331, 31
        %s333 = scalar_select %p332, %s331, 31
        %s334 = smul.addr %s333, 8
        %s335 = scalar_lea.vmem %s0, %s334
        %s336 = smul.u32 16, %s17
      $region60: #{tpu_custom_call.1} parent=55 // pred_fallthru
        _
    $region56: #{tpu_custom_call.1} parent=5 // pred_fallthru
      _
    %p337 = scmp.le.s32.totalorder 1, %s17
    %p338 = scmp.lt.s32.totalorder %s17, 3
    %p339 = pnand %p337, %p338
    %p340 = pneg %p339
    // Predicated region
    $region61: #{tpu_custom_call.1} parent=5 // pred_check
      _
    $region62: #{tpu_custom_call.1} parent=5 // pred_check_branch
      %342 = sbr.rel (%p339) target = $region64
    $region63: #{tpu_custom_call.1} parent=5 // pred_region
      %s343 = ssub.s32 %s17, 1
      %s344 = smul.u32 16, %s22
      %p345 = scmp.lt.s32.totalorder %s344, 31
      %s346 = scalar_select %p345, %s344, 31
      %s347 = smul.addr %s346, 8
      %s348 = scalar_lea.vmem %s0, %s347
      %p349 = pneg %p43
      %p350 = pneg %p40
      %p351 = pneg %p64
      %p352 = pneg %p61
      %p353 = pneg %p85
      %p354 = pneg %p82
      %p355 = pneg %p106
      %p356 = pneg %p103
      %p357 = pneg %p127
      %p358 = pneg %p124
      %p359 = pneg %p148
      %p360 = pneg %p145
      %p361 = pneg %p169
      %p362 = pneg %p166
      %p363 = pneg %p190
      %p364 = pneg %p187
      %p365 = pneg %p211
      %p366 = pneg %p208
      %p367 = pneg %p232
      %p368 = pneg %p229
      %p369 = pneg %p253
      %p370 = pneg %p250
      %p371 = pneg %p279
      %p372 = pneg %p276
      %s373 = smul.u32 16, %s22
      %p374 = scmp.lt.s32.totalorder %s373, 31
      %s375 = scalar_select %p374, %s373, 31
      %s376 = smul.addr %s375, 8
      %s377 = scalar_lea.vmem %s11, %s376
      %s378 = smul.u32 16, %s22
      %p379 = scmp.lt.s32.totalorder %s378, 31
      %s380 = scalar_select %p379, %s378, 31
      %s381 = smul.addr %s380, 8
      %s382 = scalar_lea.vmem %s0, %s381
      %s383 = smul.u32 16, %s22
      %s384 = smul.u32 16, %s22
      %p385 = scmp.lt.s32.totalorder %s384, 31
      %s386 = scalar_select %p385, %s384, 31
      %s387 = smul.addr %s386, 8
      %s388 = scalar_lea.vmem %s11, %s387
      %s389 = smul.u32 16, %s22
      %v390 = vld [vmem:[%s382] sm:$0xff]
      %v391 = vld [vmem:[%s382 + $0x8] sm:$0xff]
      %v392 = vld [vmem:[%s382 + $0x10] sm:$0xff]
      %v393 = vld [vmem:[%s382 + $0x18] sm:$0xff]
      %v394 = vld [vmem:[%s382 + $0x20] sm:$0xff]
      %v395 = vld [vmem:[%s382 + $0x28] sm:$0xff]
      %v396 = vld [vmem:[%s382 + $0x30] sm:$0xff]
      %v397 = vld [vmem:[%s382 + $0x38] sm:$0xff]
      %v398 = vld [vmem:[%s382 + $0x40] sm:$0xff]
      %v399 = vld [vmem:[%s382 + $0x48] sm:$0xff]
      %v400 = vld [vmem:[%s382 + $0x50] sm:$0xff]
      %v401 = vld [vmem:[%s382 + $0x58] sm:$0xff]
      %v402 = vld [vmem:[%s382 + $0x60] sm:$0xff]
      %v403 = vld [vmem:[%s382 + $0x68] sm:$0xff]
      %v404 = vld [vmem:[%s382 + $0x70] sm:$0xff]
      %v405 = vld [vmem:[%s382 + $0x78] sm:$0xff]
      %v406 = vld [vmem:[%s1] sm:$0xff]
      %v407 = vld [vmem:[%s1 + $0x8] sm:$0xff]
      %v408 = vld [vmem:[%s2] sm:$0x1]
      %v410 = vlaneseq
      %v411 = vshrl.u32 %v410, 7
      %v412 = vsub.s32 0, %v411
      %v413 = vrot.slane %v408, %v412
      %vm415 = vcmask 130048
      %v417 = vsel %vm415, %v390, 0
      %v420 = vsel %vm415, %v391, 0
      %v423 = vsel %vm415, %v392, 0
      %v426 = vsel %vm415, %v393, 0
      %v429 = vsel %vm415, %v394, 0
      %v432 = vsel %vm415, %v395, 0
      %v435 = vsel %vm415, %v396, 0
      %v438 = vsel %vm415, %v397, 0
      %v441 = vsel %vm415, %v398, 0
      %v444 = vsel %vm415, %v399, 0
      %v447 = vsel %vm415, %v400, 0
      %v450 = vsel %vm415, %v401, 0
      %v453 = vsel %vm415, %v402, 0
      %v456 = vsel %vm415, %v403, 0
      %v459 = vsel %vm415, %v404, 0
      %v462 = vsel %vm415, %v405, 0
      %464 = vmatprep.subr.mxu0 0.0
      %465 = vmatpush1.msra.mxu0 %v406
      %466 = vmatprep.subr.mxu0 0.0
      %467 = vmatpush1.msra.mxu0 %v407
      %468 = vmatprep.subr.mxu0 0.0
      %469 = vmatpush1.msra.mxu0 0.0
      %470 = vmatprep.subr.mxu0 0.0
      %471 = vmatpush1.msra.mxu0 0.0
      %472 = vmatprep.subr.mxu0 0.0
      %473 = vmatpush1.msra.mxu0 0.0
      %474 = vmatprep.subr.mxu0 0.0
      %475 = vmatpush1.msra.mxu0 0.0
      %476 = vmatprep.subr.mxu0 0.0
      %477 = vmatpush1.msra.mxu0 0.0
      %478 = vmatprep.subr.mxu0 0.0
      %479 = vmatpush1.msra.mxu0 0.0
      %480 = vmatprep.subr.mxu0 0.0
      %481 = vmatpush1.msra.mxu0 0.0
      %482 = vmatprep.subr.mxu0 0.0
      %483 = vmatpush1.msra.mxu0 0.0
      %484 = vmatprep.subr.mxu0 0.0
      %485 = vmatpush1.msra.mxu0 0.0
      %486 = vmatprep.subr.mxu0 0.0
      %487 = vmatpush1.msra.mxu0 0.0
      %488 = vmatprep.subr.mxu0 0.0
      %489 = vmatpush1.msra.mxu0 0.0
      %490 = vmatprep.subr.mxu0 0.0
      %491 = vmatpush1.msra.mxu0 0.0
      %492 = vmatprep.subr.mxu0 0.0
      %493 = vmatpush1.msra.mxu0 0.0
      %494 = vmatprep.subr.mxu0 0.0
      %495 = vmatpush1.msra.mxu0 0.0
      %496 = vmatprep.subr.mxu0 0.0
      %497 = vmatpush1.msra.mxu0 0.0
      %498 = vmatprep.subr.mxu0 0.0
      %499 = vmatpush1.msra.mxu0 0.0
      %500 = vmatprep.subr.mxu0 0.0
      %501 = vmatpush1.msra.mxu0 0.0
      %502 = vmatprep.subr.mxu0 0.0
      %503 = vmatpush1.msra.mxu0 0.0
      %504 = vmatprep.subr.mxu0 0.0
      %505 = vmatpush1.msra.mxu0 0.0
      %506 = vmatprep.subr.mxu0 0.0
      %507 = vmatpush1.msra.mxu0 0.0
      %508 = vmatprep.subr.mxu0 0.0
      %509 = vmatpush1.msra.mxu0 0.0
      %510 = vmatprep.subr.mxu0 0.0
      %511 = vmatpush1.msra.mxu0 0.0
      %512 = vmatprep.subr.mxu0 0.0
      %513 = vmatpush1.msra.mxu0 0.0
      %514 = vmatprep.subr.mxu0 0.0
      %515 = vmatpush1.msra.mxu0 0.0
      %516 = vmatprep.subr.mxu0 0.0
      %517 = vmatpush1.msra.mxu0 0.0
      %518 = vmatprep.subr.mxu0 0.0
      %519 = vmatpush1.msra.mxu0 0.0
      %520 = vmatprep.subr.mxu0 0.0
      %521 = vmatpush1.msra.mxu0 0.0
      %522 = vmatprep.subr.mxu0 0.0
      %523 = vmatpush1.msra.mxu0 0.0
      %524 = vmatprep.subr.mxu0 0.0
      %525 = vmatpush1.msra.mxu0 0.0
      %526 = vmatprep.subr.mxu0 0.0
      %527 = vmatpush1.msra.mxu0 0.0
      %528 = vmatprep.mubr.f32.mxu0 0.0
      %529 = vmatmul.mubr.f32.gmra.mrb[0].mxu0 %v417
      %v530 = vpop.f32.mrb[0].mxu0
      %v531 = vadd.f32 %v413, %v530
      %v532 = vpop.f32.mrb[0].mxu0
      %533 = vmatprep.mubr.f32.mxu0 0.0
      %534 = vmatmul.mubr.f32.gmra.mrb[0].mxu0 %v420
      %v535 = vpop.f32.mrb[0].mxu0
      %v536 = vadd.f32 %v413, %v535
      %v537 = vpop.f32.mrb[0].mxu0
      %538 = vmatprep.mubr.f32.mxu0 0.0
      %539 = vmatmul.mubr.f32.gmra.mrb[0].mxu0 %v423
      %v540 = vpop.f32.mrb[0].mxu0
      %v541 = vadd.f32 %v413, %v540
      %v542 = vpop.f32.mrb[0].mxu0
      %543 = vmatprep.mubr.f32.mxu0 0.0
      %544 = vmatmul.mubr.f32.gmra.mrb[0].mxu0 %v426
      %v545 = vpop.f32.mrb[0].mxu0
      %v546 = vadd.f32 %v413, %v545
      %v547 = vpop.f32.mrb[0].mxu0
      %548 = vmatprep.mubr.f32.mxu0 0.0
      %549 = vmatmul.mubr.f32.gmra.mrb[0].mxu0 %v429
      %v550 = vpop.f32.mrb[0].mxu0
      %v551 = vadd.f32 %v413, %v550
      %v552 = vpop.f32.mrb[0].mxu0
      %553 = vmatprep.mubr.f32.mxu0 0.0
      %554 = vmatmul.mubr.f32.gmra.mrb[0].mxu0 %v432
      %v555 = vpop.f32.mrb[0].mxu0
      %v556 = vadd.f32 %v413, %v555
      %v557 = vpop.f32.mrb[0].mxu0
      %558 = vmatprep.mubr.f32.mxu0 0.0
      %559 = vmatmul.mubr.f32.gmra.mrb[0].mxu0 %v435
      %v560 = vpop.f32.mrb[0].mxu0
      %v561 = vadd.f32 %v413, %v560
      %v562 = vpop.f32.mrb[0].mxu0
      %563 = vmatprep.mubr.f32.mxu0 0.0
      %564 = vmatmul.mubr.f32.gmra.mrb[0].mxu0 %v438
      %v565 = vpop.f32.mrb[0].mxu0
      %v566 = vadd.f32 %v413, %v565
      %v567 = vpop.f32.mrb[0].mxu0
      %568 = vmatprep.mubr.f32.mxu0 0.0
      %569 = vmatmul.mubr.f32.gmra.mrb[0].mxu0 %v441
      %v570 = vpop.f32.mrb[0].mxu0
      %v571 = vadd.f32 %v413, %v570
      %v572 = vpop.f32.mrb[0].mxu0
      %573 = vmatprep.mubr.f32.mxu0 0.0
      %574 = vmatmul.mubr.f32.gmra.mrb[0].mxu0 %v444
      %v575 = vpop.f32.mrb[0].mxu0
      %v576 = vadd.f32 %v413, %v575
      %v577 = vpop.f32.mrb[0].mxu0
      %578 = vmatprep.mubr.f32.mxu0 0.0
      %579 = vmatmul.mubr.f32.gmra.mrb[0].mxu0 %v447
      %v580 = vpop.f32.mrb[0].mxu0
      %v581 = vadd.f32 %v413, %v580
      %v582 = vpop.f32.mrb[0].mxu0
      %583 = vmatprep.mubr.f32.mxu0 0.0
      %584 = vmatmul.mubr.f32.gmra.mrb[0].mxu0 %v450
      %v585 = vpop.f32.mrb[0].mxu0
      %v586 = vadd.f32 %v413, %v585
      %v587 = vpop.f32.mrb[0].mxu0
      %588 = vmatprep.mubr.f32.mxu0 0.0
      %589 = vmatmul.mubr.f32.gmra.mrb[0].mxu0 %v453
      %v590 = vpop.f32.mrb[0].mxu0
      %v591 = vadd.f32 %v413, %v590
      %v592 = vpop.f32.mrb[0].mxu0
      %593 = vmatprep.mubr.f32.mxu0 0.0
      %594 = vmatmul.mubr.f32.gmra.mrb[0].mxu0 %v456
      %v595 = vpop.f32.mrb[0].mxu0
      %v596 = vadd.f32 %v413, %v595
      %v597 = vpop.f32.mrb[0].mxu0
      %598 = vmatprep.mubr.f32.mxu0 0.0
      %599 = vmatmul.mubr.f32.gmra.mrb[0].mxu0 %v459
      %v600 = vpop.f32.mrb[0].mxu0
      %v601 = vadd.f32 %v413, %v600
      %v602 = vpop.f32.mrb[0].mxu0
      %603 = vmatprep.mubr.f32.mxu0 0.0
      %604 = vmatmul.mubr.f32.gmra.mrb[0].mxu0 %v462
      %v605 = vpop.f32.mrb[0].mxu0
      %v606 = vadd.f32 %v413, %v605
      %v607 = vpop.f32.mrb[0].mxu0
      %608 = vdwg.mxu0
      %v609 = vtanh.pop %v531
      %v610 = vtanh.pop %v536
      %v611 = vtanh.pop %v541
      %v612 = vtanh.pop %v546
      %v613 = vtanh.pop %v551
      %v614 = vtanh.pop %v556
      %v615 = vtanh.pop %v561
      %v616 = vtanh.pop %v566
      %v617 = vtanh.pop %v571
      %v618 = vtanh.pop %v576
      %v619 = vtanh.pop %v581
      %v620 = vtanh.pop %v586
      %v621 = vtanh.pop %v591
      %v622 = vtanh.pop %v596
      %v623 = vtanh.pop %v601
      %v624 = vtanh.pop %v606
      %v625 = vld [vmem:[%s3] sm:$0xff]
      %v626 = vld [vmem:[%s3 + $0x8] sm:$0xff]
      %v627 = vld [vmem:[%s3 + $0x10] sm:$0xff]
      %v628 = vld [vmem:[%s3 + $0x18] sm:$0xff]
      %v629 = vld [vmem:[%s4] sm:$0x1]
      %v631 = vlaneseq
      %v632 = vshrl.u32 %v631, 7
      %v633 = vsub.s32 0, %v632
      %v634 = vrot.slane %v629, %v633
      %vm636 = vcmask 261120
      %v638 = vsel %vm636, %v609, 0
      %v641 = vsel %vm636, %v610, 0
      %v644 = vsel %vm636, %v611, 0
      %v647 = vsel %vm636, %v612, 0
      %v650 = vsel %vm636, %v613, 0
      %v653 = vsel %vm636, %v614, 0
      %v656 = vsel %vm636, %v615, 0
      %v659 = vsel %vm636, %v616, 0
      %v662 = vsel %vm636, %v617, 0
      %v665 = vsel %vm636, %v618, 0
      %v668 = vsel %vm636, %v619, 0
      %v671 = vsel %vm636, %v620, 0
      %v674 = vsel %vm636, %v621, 0
      %v677 = vsel %vm636, %v622, 0
      %v680 = vsel %vm636, %v623, 0
      %v683 = vsel %vm636, %v624, 0
      %685 = vmatprep.subr.mxu0 0.0
      %686 = vmatpush1.msra.mxu0 %v625
      %687 = vmatprep.subr.mxu0 0.0
      %688 = vmatpush1.msra.mxu0 %v626
      %689 = vmatprep.subr.mxu0 0.0
      %690 = vmatpush1.msra.mxu0 %v627
      %691 = vmatprep.subr.mxu0 0.0
      %692 = vmatpush1.msra.mxu0 %v628
      %693 = vmatprep.subr.mxu0 0.0
      %694 = vmatpush1.msra.mxu0 0.0
      %695 = vmatprep.subr.mxu0 0.0
      %696 = vmatpush1.msra.mxu0 0.0
      %697 = vmatprep.subr.mxu0 0.0
      %698 = vmatpush1.msra.mxu0 0.0
      %699 = vmatprep.subr.mxu0 0.0
      %700 = vmatpush1.msra.mxu0 0.0
      %701 = vmatprep.subr.mxu0 0.0
      %702 = vmatpush1.msra.mxu0 0.0
      %703 = vmatprep.subr.mxu0 0.0
      %704 = vmatpush1.msra.mxu0 0.0
      %705 = vmatprep.subr.mxu0 0.0
      %706 = vmatpush1.msra.mxu0 0.0
      %707 = vmatprep.subr.mxu0 0.0
      %708 = vmatpush1.msra.mxu0 0.0
      %709 = vmatprep.subr.mxu0 0.0
      %710 = vmatpush1.msra.mxu0 0.0
      %711 = vmatprep.subr.mxu0 0.0
      %712 = vmatpush1.msra.mxu0 0.0
      %713 = vmatprep.subr.mxu0 0.0
      %714 = vmatpush1.msra.mxu0 0.0
      %715 = vmatprep.subr.mxu0 0.0
      %716 = vmatpush1.msra.mxu0 0.0
      %717 = vmatprep.subr.mxu0 0.0
      %718 = vmatpush1.msra.mxu0 0.0
      %719 = vmatprep.subr.mxu0 0.0
      %720 = vmatpush1.msra.mxu0 0.0
      %721 = vmatprep.subr.mxu0 0.0
      %722 = vmatpush1.msra.mxu0 0.0
      %723 = vmatprep.subr.mxu0 0.0
      %724 = vmatpush1.msra.mxu0 0.0
      %725 = vmatprep.subr.mxu0 0.0
      %726 = vmatpush1.msra.mxu0 0.0
      %727 = vmatprep.subr.mxu0 0.0
      %728 = vmatpush1.msra.mxu0 0.0
      %729 = vmatprep.subr.mxu0 0.0
      %730 = vmatpush1.msra.mxu0 0.0
      %731 = vmatprep.subr.mxu0 0.0
      %732 = vmatpush1.msra.mxu0 0.0
      %733 = vmatprep.subr.mxu0 0.0
      %734 = vmatpush1.msra.mxu0 0.0
      %735 = vmatprep.subr.mxu0 0.0
      %736 = vmatpush1.msra.mxu0 0.0
      %737 = vmatprep.subr.mxu0 0.0
      %738 = vmatpush1.msra.mxu0 0.0
      %739 = vmatprep.subr.mxu0 0.0
      %740 = vmatpush1.msra.mxu0 0.0
      %741 = vmatprep.subr.mxu0 0.0
      %742 = vmatpush1.msra.mxu0 0.0
      %743 = vmatprep.subr.mxu0 0.0
      %744 = vmatpush1.msra.mxu0 0.0
      %745 = vmatprep.subr.mxu0 0.0
      %746 = vmatpush1.msra.mxu0 0.0
      %747 = vmatprep.subr.mxu0 0.0
      %748 = vmatpush1.msra.mxu0 0.0
      %749 = vmatprep.mubr.f32.mxu0 0.0
      %750 = vmatmul.mubr.f32.gmra.mrb[0].mxu0 %v638
      %v751 = vpop.f32.mrb[0].mxu0
      %v752 = vadd.f32 %v634, %v751
      %v753 = vpop.f32.mrb[0].mxu0
      %754 = vmatprep.mubr.f32.mxu0 0.0
      %755 = vmatmul.mubr.f32.gmra.mrb[0].mxu0 %v641
      %v756 = vpop.f32.mrb[0].mxu0
      %v757 = vadd.f32 %v634, %v756
      %v758 = vpop.f32.mrb[0].mxu0
      %759 = vmatprep.mubr.f32.mxu0 0.0
      %760 = vmatmul.mubr.f32.gmra.mrb[0].mxu0 %v644
      %v761 = vpop.f32.mrb[0].mxu0
      %v762 = vadd.f32 %v634, %v761
      %v763 = vpop.f32.mrb[0].mxu0
      %764 = vmatprep.mubr.f32.mxu0 0.0
      %765 = vmatmul.mubr.f32.gmra.mrb[0].mxu0 %v647
      %v766 = vpop.f32.mrb[0].mxu0
      %v767 = vadd.f32 %v634, %v766
      %v768 = vpop.f32.mrb[0].mxu0
      %769 = vmatprep.mubr.f32.mxu0 0.0
      %770 = vmatmul.mubr.f32.gmra.mrb[0].mxu0 %v650
      %v771 = vpop.f32.mrb[0].mxu0
      %v772 = vadd.f32 %v634, %v771
      %v773 = vpop.f32.mrb[0].mxu0
      %774 = vmatprep.mubr.f32.mxu0 0.0
      %775 = vmatmul.mubr.f32.gmra.mrb[0].mxu0 %v653
      %v776 = vpop.f32.mrb[0].mxu0
      %v777 = vadd.f32 %v634, %v776
      %v778 = vpop.f32.mrb[0].mxu0
      %779 = vmatprep.mubr.f32.mxu0 0.0
      %780 = vmatmul.mubr.f32.gmra.mrb[0].mxu0 %v656
      %v781 = vpop.f32.mrb[0].mxu0
      %v782 = vadd.f32 %v634, %v781
      %v783 = vpop.f32.mrb[0].mxu0
      %784 = vmatprep.mubr.f32.mxu0 0.0
      %785 = vmatmul.mubr.f32.gmra.mrb[0].mxu0 %v659
      %v786 = vpop.f32.mrb[0].mxu0
      %v787 = vadd.f32 %v634, %v786
      %v788 = vpop.f32.mrb[0].mxu0
      %789 = vmatprep.mubr.f32.mxu0 0.0
      %790 = vmatmul.mubr.f32.gmra.mrb[0].mxu0 %v662
      %v791 = vpop.f32.mrb[0].mxu0
      %v792 = vadd.f32 %v634, %v791
      %v793 = vpop.f32.mrb[0].mxu0
      %794 = vmatprep.mubr.f32.mxu0 0.0
      %795 = vmatmul.mubr.f32.gmra.mrb[0].mxu0 %v665
      %v796 = vpop.f32.mrb[0].mxu0
      %v797 = vadd.f32 %v634, %v796
      %v798 = vpop.f32.mrb[0].mxu0
      %799 = vmatprep.mubr.f32.mxu0 0.0
      %800 = vmatmul.mubr.f32.gmra.mrb[0].mxu0 %v668
      %v801 = vpop.f32.mrb[0].mxu0
      %v802 = vadd.f32 %v634, %v801
      %v803 = vpop.f32.mrb[0].mxu0
      %804 = vmatprep.mubr.f32.mxu0 0.0
      %805 = vmatmul.mubr.f32.gmra.mrb[0].mxu0 %v671
      %v806 = vpop.f32.mrb[0].mxu0
      %v807 = vadd.f32 %v634, %v806
      %v808 = vpop.f32.mrb[0].mxu0
      %809 = vmatprep.mubr.f32.mxu0 0.0
      %810 = vmatmul.mubr.f32.gmra.mrb[0].mxu0 %v674
      %v811 = vpop.f32.mrb[0].mxu0
      %v812 = vadd.f32 %v634, %v811
      %v813 = vpop.f32.mrb[0].mxu0
      %814 = vmatprep.mubr.f32.mxu0 0.0
      %815 = vmatmul.mubr.f32.gmra.mrb[0].mxu0 %v677
      %v816 = vpop.f32.mrb[0].mxu0
      %v817 = vadd.f32 %v634, %v816
      %v818 = vpop.f32.mrb[0].mxu0
      %819 = vmatprep.mubr.f32.mxu0 0.0
      %820 = vmatmul.mubr.f32.gmra.mrb[0].mxu0 %v680
      %v821 = vpop.f32.mrb[0].mxu0
      %v822 = vadd.f32 %v634, %v821
      %v823 = vpop.f32.mrb[0].mxu0
      %824 = vmatprep.mubr.f32.mxu0 0.0
      %825 = vmatmul.mubr.f32.gmra.mrb[0].mxu0 %v683
      %v826 = vpop.f32.mrb[0].mxu0
      %v827 = vadd.f32 %v634, %v826
      %v828 = vpop.f32.mrb[0].mxu0
      %829 = vdwg.mxu0
      %v830 = vtanh.pop %v752
      %v831 = vtanh.pop %v757
      %v832 = vtanh.pop %v762
      %v833 = vtanh.pop %v767
      %v834 = vtanh.pop %v772
      %v835 = vtanh.pop %v777
      %v836 = vtanh.pop %v782
      %v837 = vtanh.pop %v787
      %v838 = vtanh.pop %v792
      %v839 = vtanh.pop %v797
      %v840 = vtanh.pop %v802
      %v841 = vtanh.pop %v807
      %v842 = vtanh.pop %v812
      %v843 = vtanh.pop %v817
      %v844 = vtanh.pop %v822
      %v845 = vtanh.pop %v827
      %v846 = vld [vmem:[%s5] sm:$0xff]
      %v847 = vld [vmem:[%s5 + $0x8] sm:$0xff]
      %v848 = vld [vmem:[%s5 + $0x10] sm:$0xff]
      %v849 = vld [vmem:[%s5 + $0x18] sm:$0xff]
      %v850 = vld [vmem:[%s6] sm:$0x1]
      %v852 = vlaneseq
      %v853 = vshrl.u32 %v852, 7
      %v854 = vsub.s32 0, %v853
      %v855 = vrot.slane %v850, %v854
      %v858 = vsel %vm636, %v830, 0
      %v861 = vsel %vm636, %v831, 0
      %v864 = vsel %vm636, %v832, 0
      %v867 = vsel %vm636, %v833, 0
      %v870 = vsel %vm636, %v834, 0
      %v873 = vsel %vm636, %v835, 0
      %v876 = vsel %vm636, %v836, 0
      %v879 = vsel %vm636, %v837, 0
      %v882 = vsel %vm636, %v838, 0
      %v885 = vsel %vm636, %v839, 0
      %v888 = vsel %vm636, %v840, 0
      %v891 = vsel %vm636, %v841, 0
      %v894 = vsel %vm636, %v842, 0
      %v897 = vsel %vm636, %v843, 0
      %v900 = vsel %vm636, %v844, 0
      %v903 = vsel %vm636, %v845, 0
      %905 = vmatprep.subr.mxu0 0.0
      %906 = vmatpush1.msra.mxu0 %v846
      %907 = vmatprep.subr.mxu0 0.0
      %908 = vmatpush1.msra.mxu0 %v847
      %909 = vmatprep.subr.mxu0 0.0
      %910 = vmatpush1.msra.mxu0 %v848
      %911 = vmatprep.subr.mxu0 0.0
      %912 = vmatpush1.msra.mxu0 %v849
      %913 = vmatprep.subr.mxu0 0.0
      %914 = vmatpush1.msra.mxu0 0.0
      %915 = vmatprep.subr.mxu0 0.0
      %916 = vmatpush1.msra.mxu0 0.0
      %917 = vmatprep.subr.mxu0 0.0
      %918 = vmatpush1.msra.mxu0 0.0
      %919 = vmatprep.subr.mxu0 0.0
      %920 = vmatpush1.msra.mxu0 0.0
      %921 = vmatprep.subr.mxu0 0.0
      %922 = vmatpush1.msra.mxu0 0.0
      %923 = vmatprep.subr.mxu0 0.0
      %924 = vmatpush1.msra.mxu0 0.0
      %925 = vmatprep.subr.mxu0 0.0
      %926 = vmatpush1.msra.mxu0 0.0
      %927 = vmatprep.subr.mxu0 0.0
      %928 = vmatpush1.msra.mxu0 0.0
      %929 = vmatprep.subr.mxu0 0.0
      %930 = vmatpush1.msra.mxu0 0.0
      %931 = vmatprep.subr.mxu0 0.0
      %932 = vmatpush1.msra.mxu0 0.0
      %933 = vmatprep.subr.mxu0 0.0
      %934 = vmatpush1.msra.mxu0 0.0
      %935 = vmatprep.subr.mxu0 0.0
      %936 = vmatpush1.msra.mxu0 0.0
      %937 = vmatprep.subr.mxu0 0.0
      %938 = vmatpush1.msra.mxu0 0.0
      %939 = vmatprep.subr.mxu0 0.0
      %940 = vmatpush1.msra.mxu0 0.0
      %941 = vmatprep.subr.mxu0 0.0
      %942 = vmatpush1.msra.mxu0 0.0
      %943 = vmatprep.subr.mxu0 0.0
      %944 = vmatpush1.msra.mxu0 0.0
      %945 = vmatprep.subr.mxu0 0.0
      %946 = vmatpush1.msra.mxu0 0.0
      %947 = vmatprep.subr.mxu0 0.0
      %948 = vmatpush1.msra.mxu0 0.0
      %949 = vmatprep.subr.mxu0 0.0
      %950 = vmatpush1.msra.mxu0 0.0
      %951 = vmatprep.subr.mxu0 0.0
      %952 = vmatpush1.msra.mxu0 0.0
      %953 = vmatprep.subr.mxu0 0.0
      %954 = vmatpush1.msra.mxu0 0.0
      %955 = vmatprep.subr.mxu0 0.0
      %956 = vmatpush1.msra.mxu0 0.0
      %957 = vmatprep.subr.mxu0 0.0
      %958 = vmatpush1.msra.mxu0 0.0
      %959 = vmatprep.subr.mxu0 0.0
      %960 = vmatpush1.msra.mxu0 0.0
      %961 = vmatprep.subr.mxu0 0.0
      %962 = vmatpush1.msra.mxu0 0.0
      %963 = vmatprep.subr.mxu0 0.0
      %964 = vmatpush1.msra.mxu0 0.0
      %965 = vmatprep.subr.mxu0 0.0
      %966 = vmatpush1.msra.mxu0 0.0
      %967 = vmatprep.subr.mxu0 0.0
      %968 = vmatpush1.msra.mxu0 0.0
      %969 = vmatprep.mubr.f32.mxu0 0.0
      %970 = vmatmul.mubr.f32.gmra.mrb[0].mxu0 %v858
      %v971 = vpop.f32.mrb[0].mxu0
      %v972 = vadd.f32 %v855, %v971
      %v973 = vpop.f32.mrb[0].mxu0
      %974 = vmatprep.mubr.f32.mxu0 0.0
      %975 = vmatmul.mubr.f32.gmra.mrb[0].mxu0 %v861
      %v976 = vpop.f32.mrb[0].mxu0
      %v977 = vadd.f32 %v855, %v976
      %v978 = vpop.f32.mrb[0].mxu0
      %979 = vmatprep.mubr.f32.mxu0 0.0
      %980 = vmatmul.mubr.f32.gmra.mrb[0].mxu0 %v864
      %v981 = vpop.f32.mrb[0].mxu0
      %v982 = vadd.f32 %v855, %v981
      %v983 = vpop.f32.mrb[0].mxu0
      %984 = vmatprep.mubr.f32.mxu0 0.0
      %985 = vmatmul.mubr.f32.gmra.mrb[0].mxu0 %v867
      %v986 = vpop.f32.mrb[0].mxu0
      %v987 = vadd.f32 %v855, %v986
      %v988 = vpop.f32.mrb[0].mxu0
      %989 = vmatprep.mubr.f32.mxu0 0.0
      %990 = vmatmul.mubr.f32.gmra.mrb[0].mxu0 %v870
      %v991 = vpop.f32.mrb[0].mxu0
      %v992 = vadd.f32 %v855, %v991
      %v993 = vpop.f32.mrb[0].mxu0
      %994 = vmatprep.mubr.f32.mxu0 0.0
      %995 = vmatmul.mubr.f32.gmra.mrb[0].mxu0 %v873
      %v996 = vpop.f32.mrb[0].mxu0
      %v997 = vadd.f32 %v855, %v996
      %v998 = vpop.f32.mrb[0].mxu0
      %999 = vmatprep.mubr.f32.mxu0 0.0
      %1000 = vmatmul.mubr.f32.gmra.mrb[0].mxu0 %v876
      %v1001 = vpop.f32.mrb[0].mxu0
      %v1002 = vadd.f32 %v855, %v1001
      %v1003 = vpop.f32.mrb[0].mxu0
      %1004 = vmatprep.mubr.f32.mxu0 0.0
      %1005 = vmatmul.mubr.f32.gmra.mrb[0].mxu0 %v879
      %v1006 = vpop.f32.mrb[0].mxu0
      %v1007 = vadd.f32 %v855, %v1006
      %v1008 = vpop.f32.mrb[0].mxu0
      %1009 = vmatprep.mubr.f32.mxu0 0.0
      %1010 = vmatmul.mubr.f32.gmra.mrb[0].mxu0 %v882
      %v1011 = vpop.f32.mrb[0].mxu0
      %v1012 = vadd.f32 %v855, %v1011
      %v1013 = vpop.f32.mrb[0].mxu0
      %1014 = vmatprep.mubr.f32.mxu0 0.0
      %1015 = vmatmul.mubr.f32.gmra.mrb[0].mxu0 %v885
      %v1016 = vpop.f32.mrb[0].mxu0
      %v1017 = vadd.f32 %v855, %v1016
      %v1018 = vpop.f32.mrb[0].mxu0
      %1019 = vmatprep.mubr.f32.mxu0 0.0
      %1020 = vmatmul.mubr.f32.gmra.mrb[0].mxu0 %v888
      %v1021 = vpop.f32.mrb[0].mxu0
      %v1022 = vadd.f32 %v855, %v1021
      %v1023 = vpop.f32.mrb[0].mxu0
      %1024 = vmatprep.mubr.f32.mxu0 0.0
      %1025 = vmatmul.mubr.f32.gmra.mrb[0].mxu0 %v891
      %v1026 = vpop.f32.mrb[0].mxu0
      %v1027 = vadd.f32 %v855, %v1026
      %v1028 = vpop.f32.mrb[0].mxu0
      %1029 = vmatprep.mubr.f32.mxu0 0.0
      %1030 = vmatmul.mubr.f32.gmra.mrb[0].mxu0 %v894
      %v1031 = vpop.f32.mrb[0].mxu0
      %v1032 = vadd.f32 %v855, %v1031
      %v1033 = vpop.f32.mrb[0].mxu0
      %1034 = vmatprep.mubr.f32.mxu0 0.0
      %1035 = vmatmul.mubr.f32.gmra.mrb[0].mxu0 %v897
      %v1036 = vpop.f32.mrb[0].mxu0
      %v1037 = vadd.f32 %v855, %v1036
      %v1038 = vpop.f32.mrb[0].mxu0
      %1039 = vmatprep.mubr.f32.mxu0 0.0
      %1040 = vmatmul.mubr.f32.gmra.mrb[0].mxu0 %v900
      %v1041 = vpop.f32.mrb[0].mxu0
      %v1042 = vadd.f32 %v855, %v1041
      %v1043 = vpop.f32.mrb[0].mxu0
      %1044 = vmatprep.mubr.f32.mxu0 0.0
      %1045 = vmatmul.mubr.f32.gmra.mrb[0].mxu0 %v903
      %v1046 = vpop.f32.mrb[0].mxu0
      %v1047 = vadd.f32 %v855, %v1046
      %v1048 = vpop.f32.mrb[0].mxu0
      %1049 = vdwg.mxu0
      %v1050 = vtanh.pop %v972
      %v1051 = vtanh.pop %v977
      %v1052 = vtanh.pop %v982
      %v1053 = vtanh.pop %v987
      %v1054 = vtanh.pop %v992
      %v1055 = vtanh.pop %v997
      %v1056 = vtanh.pop %v1002
      %v1057 = vtanh.pop %v1007
      %v1058 = vtanh.pop %v1012
      %v1059 = vtanh.pop %v1017
      %v1060 = vtanh.pop %v1022
      %v1061 = vtanh.pop %v1027
      %v1062 = vtanh.pop %v1032
      %v1063 = vtanh.pop %v1037
      %v1064 = vtanh.pop %v1042
      %v1065 = vtanh.pop %v1047
      %v1066 = vld [vmem:[%s7] sm:$0xff]
      %v1067 = vld [vmem:[%s7 + $0x8] sm:$0xff]
      %v1068 = vld [vmem:[%s7 + $0x10] sm:$0xff]
      %v1069 = vld [vmem:[%s7 + $0x18] sm:$0xff]
      %v1070 = vld [vmem:[%s8] sm:$0x1]
      %v1072 = vlaneseq
      %v1073 = vshrl.u32 %v1072, 7
      %v1074 = vsub.s32 0, %v1073
      %v1075 = vrot.slane %v1070, %v1074
      %v1078 = vsel %vm636, %v1050, 0
      %v1081 = vsel %vm636, %v1051, 0
      %v1084 = vsel %vm636, %v1052, 0
      %v1087 = vsel %vm636, %v1053, 0
      %v1090 = vsel %vm636, %v1054, 0
      %v1093 = vsel %vm636, %v1055, 0
      %v1096 = vsel %vm636, %v1056, 0
      %v1099 = vsel %vm636, %v1057, 0
      %v1102 = vsel %vm636, %v1058, 0
      %v1105 = vsel %vm636, %v1059, 0
      %v1108 = vsel %vm636, %v1060, 0
      %v1111 = vsel %vm636, %v1061, 0
      %v1114 = vsel %vm636, %v1062, 0
      %v1117 = vsel %vm636, %v1063, 0
      %v1120 = vsel %vm636, %v1064, 0
      %v1123 = vsel %vm636, %v1065, 0
      %1125 = vmatprep.subr.mxu0 0.0
      %1126 = vmatpush1.msra.mxu0 %v1066
      %1127 = vmatprep.subr.mxu0 0.0
      %1128 = vmatpush1.msra.mxu0 %v1067
      %1129 = vmatprep.subr.mxu0 0.0
      %1130 = vmatpush1.msra.mxu0 %v1068
      %1131 = vmatprep.subr.mxu0 0.0
      %1132 = vmatpush1.msra.mxu0 %v1069
      %1133 = vmatprep.subr.mxu0 0.0
      %1134 = vmatpush1.msra.mxu0 0.0
      %1135 = vmatprep.subr.mxu0 0.0
      %1136 = vmatpush1.msra.mxu0 0.0
      %1137 = vmatprep.subr.mxu0 0.0
      %1138 = vmatpush1.msra.mxu0 0.0
      %1139 = vmatprep.subr.mxu0 0.0
      %1140 = vmatpush1.msra.mxu0 0.0
      %1141 = vmatprep.subr.mxu0 0.0
      %1142 = vmatpush1.msra.mxu0 0.0
      %1143 = vmatprep.subr.mxu0 0.0
      %1144 = vmatpush1.msra.mxu0 0.0
      %1145 = vmatprep.subr.mxu0 0.0
      %1146 = vmatpush1.msra.mxu0 0.0
      %1147 = vmatprep.subr.mxu0 0.0
      %1148 = vmatpush1.msra.mxu0 0.0
      %1149 = vmatprep.subr.mxu0 0.0
      %1150 = vmatpush1.msra.mxu0 0.0
      %1151 = vmatprep.subr.mxu0 0.0
      %1152 = vmatpush1.msra.mxu0 0.0
      %1153 = vmatprep.subr.mxu0 0.0
      %1154 = vmatpush1.msra.mxu0 0.0
      %1155 = vmatprep.subr.mxu0 0.0
      %1156 = vmatpush1.msra.mxu0 0.0
      %1157 = vmatprep.subr.mxu0 0.0
      %1158 = vmatpush1.msra.mxu0 0.0
      %1159 = vmatprep.subr.mxu0 0.0
      %1160 = vmatpush1.msra.mxu0 0.0
      %1161 = vmatprep.subr.mxu0 0.0
      %1162 = vmatpush1.msra.mxu0 0.0
      %1163 = vmatprep.subr.mxu0 0.0
      %1164 = vmatpush1.msra.mxu0 0.0
      %1165 = vmatprep.subr.mxu0 0.0
      %1166 = vmatpush1.msra.mxu0 0.0
      %1167 = vmatprep.subr.mxu0 0.0
      %1168 = vmatpush1.msra.mxu0 0.0
      %1169 = vmatprep.subr.mxu0 0.0
      %1170 = vmatpush1.msra.mxu0 0.0
      %1171 = vmatprep.subr.mxu0 0.0
      %1172 = vmatpush1.msra.mxu0 0.0
      %1173 = vmatprep.subr.mxu0 0.0
      %1174 = vmatpush1.msra.mxu0 0.0
      %1175 = vmatprep.subr.mxu0 0.0
      %1176 = vmatpush1.msra.mxu0 0.0
      %1177 = vmatprep.subr.mxu0 0.0
      %1178 = vmatpush1.msra.mxu0 0.0
      %1179 = vmatprep.subr.mxu0 0.0
      %1180 = vmatpush1.msra.mxu0 0.0
      %1181 = vmatprep.subr.mxu0 0.0
      %1182 = vmatpush1.msra.mxu0 0.0
      %1183 = vmatprep.subr.mxu0 0.0
      %1184 = vmatpush1.msra.mxu0 0.0
      %1185 = vmatprep.subr.mxu0 0.0
      %1186 = vmatpush1.msra.mxu0 0.0
      %1187 = vmatprep.subr.mxu0 0.0
      %1188 = vmatpush1.msra.mxu0 0.0
      %1189 = vmatprep.mubr.f32.mxu0 0.0
      %1190 = vmatmul.mubr.f32.gmra.mrb[0].mxu0 %v1078
      %v1191 = vpop.f32.mrb[0].mxu0
      %v1192 = vadd.f32 %v1075, %v1191
      %v1193 = vpop.f32.mrb[0].mxu0
      %1194 = vmatprep.mubr.f32.mxu0 0.0
      %1195 = vmatmul.mubr.f32.gmra.mrb[0].mxu0 %v1081
      %v1196 = vpop.f32.mrb[0].mxu0
      %v1197 = vadd.f32 %v1075, %v1196
      %v1198 = vpop.f32.mrb[0].mxu0
      %1199 = vmatprep.mubr.f32.mxu0 0.0
      %1200 = vmatmul.mubr.f32.gmra.mrb[0].mxu0 %v1084
      %v1201 = vpop.f32.mrb[0].mxu0
      %v1202 = vadd.f32 %v1075, %v1201
      %v1203 = vpop.f32.mrb[0].mxu0
      %1204 = vmatprep.mubr.f32.mxu0 0.0
      %1205 = vmatmul.mubr.f32.gmra.mrb[0].mxu0 %v1087
      %v1206 = vpop.f32.mrb[0].mxu0
      %v1207 = vadd.f32 %v1075, %v1206
      %v1208 = vpop.f32.mrb[0].mxu0
      %1209 = vmatprep.mubr.f32.mxu0 0.0
      %1210 = vmatmul.mubr.f32.gmra.mrb[0].mxu0 %v1090
      %v1211 = vpop.f32.mrb[0].mxu0
      %v1212 = vadd.f32 %v1075, %v1211
      %v1213 = vpop.f32.mrb[0].mxu0
      %1214 = vmatprep.mubr.f32.mxu0 0.0
      %1215 = vmatmul.mubr.f32.gmra.mrb[0].mxu0 %v1093
      %v1216 = vpop.f32.mrb[0].mxu0
      %v1217 = vadd.f32 %v1075, %v1216
      %v1218 = vpop.f32.mrb[0].mxu0
      %1219 = vmatprep.mubr.f32.mxu0 0.0
      %1220 = vmatmul.mubr.f32.gmra.mrb[0].mxu0 %v1096
      %v1221 = vpop.f32.mrb[0].mxu0
      %v1222 = vadd.f32 %v1075, %v1221
      %v1223 = vpop.f32.mrb[0].mxu0
      %1224 = vmatprep.mubr.f32.mxu0 0.0
      %1225 = vmatmul.mubr.f32.gmra.mrb[0].mxu0 %v1099
      %v1226 = vpop.f32.mrb[0].mxu0
      %v1227 = vadd.f32 %v1075, %v1226
      %v1228 = vpop.f32.mrb[0].mxu0
      %1229 = vmatprep.mubr.f32.mxu0 0.0
      %1230 = vmatmul.mubr.f32.gmra.mrb[0].mxu0 %v1102
      %v1231 = vpop.f32.mrb[0].mxu0
      %v1232 = vadd.f32 %v1075, %v1231
      %v1233 = vpop.f32.mrb[0].mxu0
      %1234 = vmatprep.mubr.f32.mxu0 0.0
      %1235 = vmatmul.mubr.f32.gmra.mrb[0].mxu0 %v1105
      %v1236 = vpop.f32.mrb[0].mxu0
      %v1237 = vadd.f32 %v1075, %v1236
      %v1238 = vpop.f32.mrb[0].mxu0
      %1239 = vmatprep.mubr.f32.mxu0 0.0
      %1240 = vmatmul.mubr.f32.gmra.mrb[0].mxu0 %v1108
      %v1241 = vpop.f32.mrb[0].mxu0
      %v1242 = vadd.f32 %v1075, %v1241
      %v1243 = vpop.f32.mrb[0].mxu0
      %1244 = vmatprep.mubr.f32.mxu0 0.0
      %1245 = vmatmul.mubr.f32.gmra.mrb[0].mxu0 %v1111
      %v1246 = vpop.f32.mrb[0].mxu0
      %v1247 = vadd.f32 %v1075, %v1246
      %v1248 = vpop.f32.mrb[0].mxu0
      %1249 = vmatprep.mubr.f32.mxu0 0.0
      %1250 = vmatmul.mubr.f32.gmra.mrb[0].mxu0 %v1114
      %v1251 = vpop.f32.mrb[0].mxu0
      %v1252 = vadd.f32 %v1075, %v1251
      %v1253 = vpop.f32.mrb[0].mxu0
      %1254 = vmatprep.mubr.f32.mxu0 0.0
      %1255 = vmatmul.mubr.f32.gmra.mrb[0].mxu0 %v1117
      %v1256 = vpop.f32.mrb[0].mxu0
      %v1257 = vadd.f32 %v1075, %v1256
      %v1258 = vpop.f32.mrb[0].mxu0
      %1259 = vmatprep.mubr.f32.mxu0 0.0
      %1260 = vmatmul.mubr.f32.gmra.mrb[0].mxu0 %v1120
      %v1261 = vpop.f32.mrb[0].mxu0
      %v1262 = vadd.f32 %v1075, %v1261
      %v1263 = vpop.f32.mrb[0].mxu0
      %1264 = vmatprep.mubr.f32.mxu0 0.0
      %1265 = vmatmul.mubr.f32.gmra.mrb[0].mxu0 %v1123
      %v1266 = vpop.f32.mrb[0].mxu0
      %v1267 = vadd.f32 %v1075, %v1266
      %v1268 = vpop.f32.mrb[0].mxu0
      %1269 = vdwg.mxu0
      %v1270 = vtanh.pop %v1192
      %v1271 = vtanh.pop %v1197
      %v1272 = vtanh.pop %v1202
      %v1273 = vtanh.pop %v1207
      %v1274 = vtanh.pop %v1212
      %v1275 = vtanh.pop %v1217
      %v1276 = vtanh.pop %v1222
      %v1277 = vtanh.pop %v1227
      %v1278 = vtanh.pop %v1232
      %v1279 = vtanh.pop %v1237
      %v1280 = vtanh.pop %v1242
      %v1281 = vtanh.pop %v1247
      %v1282 = vtanh.pop %v1252
      %v1283 = vtanh.pop %v1257
      %v1284 = vtanh.pop %v1262
      %v1285 = vtanh.pop %v1267
      %v1286 = vld [vmem:[%s9] sm:$0xff]
      %v1287 = vld [vmem:[%s9 + $0x8] sm:$0xff]
      %v1288 = vld [vmem:[%s9 + $0x10] sm:$0xff]
      %v1289 = vld [vmem:[%s9 + $0x18] sm:$0xff]
      %v1290 = vld [vmem:[%s10] sm:$0x1]
      %v1292 = vlaneseq
      %v1293 = vshrl.u32 %v1292, 7
      %v1294 = vsub.s32 0, %v1293
      %v1295 = vrot.slane %v1290, %v1294
      %v1298 = vsel %vm636, %v1270, 0
      %v1301 = vsel %vm636, %v1271, 0
      %v1304 = vsel %vm636, %v1272, 0
      %v1307 = vsel %vm636, %v1273, 0
      %v1310 = vsel %vm636, %v1274, 0
      %v1313 = vsel %vm636, %v1275, 0
      %v1316 = vsel %vm636, %v1276, 0
      %v1319 = vsel %vm636, %v1277, 0
      %v1322 = vsel %vm636, %v1278, 0
      %v1325 = vsel %vm636, %v1279, 0
      %v1328 = vsel %vm636, %v1280, 0
      %v1331 = vsel %vm636, %v1281, 0
      %v1334 = vsel %vm636, %v1282, 0
      %v1337 = vsel %vm636, %v1283, 0
      %v1340 = vsel %vm636, %v1284, 0
      %v1343 = vsel %vm636, %v1285, 0
      %1345 = vmatprep.subr.mxu0 0.0
      %1346 = vmatpush1.msra.mxu0 %v1286
      %1347 = vmatprep.subr.mxu0 0.0
      %1348 = vmatpush1.msra.mxu0 %v1287
      %1349 = vmatprep.subr.mxu0 0.0
      %1350 = vmatpush1.msra.mxu0 %v1288
      %1351 = vmatprep.subr.mxu0 0.0
      %1352 = vmatpush1.msra.mxu0 %v1289
      %1353 = vmatprep.subr.mxu0 0.0
      %1354 = vmatpush1.msra.mxu0 0.0
      %1355 = vmatprep.subr.mxu0 0.0
      %1356 = vmatpush1.msra.mxu0 0.0
      %1357 = vmatprep.subr.mxu0 0.0
      %1358 = vmatpush1.msra.mxu0 0.0
      %1359 = vmatprep.subr.mxu0 0.0
      %1360 = vmatpush1.msra.mxu0 0.0
      %1361 = vmatprep.subr.mxu0 0.0
      %1362 = vmatpush1.msra.mxu0 0.0
      %1363 = vmatprep.subr.mxu0 0.0
      %1364 = vmatpush1.msra.mxu0 0.0
      %1365 = vmatprep.subr.mxu0 0.0
      %1366 = vmatpush1.msra.mxu0 0.0
      %1367 = vmatprep.subr.mxu0 0.0
      %1368 = vmatpush1.msra.mxu0 0.0
      %1369 = vmatprep.subr.mxu0 0.0
      %1370 = vmatpush1.msra.mxu0 0.0
      %1371 = vmatprep.subr.mxu0 0.0
      %1372 = vmatpush1.msra.mxu0 0.0
      %1373 = vmatprep.subr.mxu0 0.0
      %1374 = vmatpush1.msra.mxu0 0.0
      %1375 = vmatprep.subr.mxu0 0.0
      %1376 = vmatpush1.msra.mxu0 0.0
      %1377 = vmatprep.subr.mxu0 0.0
      %1378 = vmatpush1.msra.mxu0 0.0
      %1379 = vmatprep.subr.mxu0 0.0
      %1380 = vmatpush1.msra.mxu0 0.0
      %1381 = vmatprep.subr.mxu0 0.0
      %1382 = vmatpush1.msra.mxu0 0.0
      %1383 = vmatprep.subr.mxu0 0.0
      %1384 = vmatpush1.msra.mxu0 0.0
      %1385 = vmatprep.subr.mxu0 0.0
      %1386 = vmatpush1.msra.mxu0 0.0
      %1387 = vmatprep.subr.mxu0 0.0
      %1388 = vmatpush1.msra.mxu0 0.0
      %1389 = vmatprep.subr.mxu0 0.0
      %1390 = vmatpush1.msra.mxu0 0.0
      %1391 = vmatprep.subr.mxu0 0.0
      %1392 = vmatpush1.msra.mxu0 0.0
      %1393 = vmatprep.subr.mxu0 0.0
      %1394 = vmatpush1.msra.mxu0 0.0
      %1395 = vmatprep.subr.mxu0 0.0
      %1396 = vmatpush1.msra.mxu0 0.0
      %1397 = vmatprep.subr.mxu0 0.0
      %1398 = vmatpush1.msra.mxu0 0.0
      %1399 = vmatprep.subr.mxu0 0.0
      %1400 = vmatpush1.msra.mxu0 0.0
      %1401 = vmatprep.subr.mxu0 0.0
      %1402 = vmatpush1.msra.mxu0 0.0
      %1403 = vmatprep.subr.mxu0 0.0
      %1404 = vmatpush1.msra.mxu0 0.0
      %1405 = vmatprep.subr.mxu0 0.0
      %1406 = vmatpush1.msra.mxu0 0.0
      %1407 = vmatprep.subr.mxu0 0.0
      %1408 = vmatpush1.msra.mxu0 0.0
      %1409 = vmatprep.mubr.f32.mxu0 0.0
      %1410 = vmatmul.mubr.f32.gmra.mrb[0].mxu0 %v1298
      %v1411 = vpop.f32.mrb[0].mxu0
      %v1412 = vadd.f32 %v1295, %v1411
      %v1413 = vpop.f32.mrb[0].mxu0
      %1414 = vmatprep.mubr.f32.mxu0 0.0
      %1415 = vmatmul.mubr.f32.gmra.mrb[0].mxu0 %v1301
      %v1416 = vpop.f32.mrb[0].mxu0
      %v1417 = vadd.f32 %v1295, %v1416
      %v1418 = vpop.f32.mrb[0].mxu0
      %1419 = vmatprep.mubr.f32.mxu0 0.0
      %1420 = vmatmul.mubr.f32.gmra.mrb[0].mxu0 %v1304
      %v1421 = vpop.f32.mrb[0].mxu0
      %v1422 = vadd.f32 %v1295, %v1421
      %v1423 = vpop.f32.mrb[0].mxu0
      %1424 = vmatprep.mubr.f32.mxu0 0.0
      %1425 = vmatmul.mubr.f32.gmra.mrb[0].mxu0 %v1307
      %v1426 = vpop.f32.mrb[0].mxu0
      %v1427 = vadd.f32 %v1295, %v1426
      %v1428 = vpop.f32.mrb[0].mxu0
      %1429 = vmatprep.mubr.f32.mxu0 0.0
      %1430 = vmatmul.mubr.f32.gmra.mrb[0].mxu0 %v1310
      %v1431 = vpop.f32.mrb[0].mxu0
      %v1432 = vadd.f32 %v1295, %v1431
      %v1433 = vpop.f32.mrb[0].mxu0
      %1434 = vmatprep.mubr.f32.mxu0 0.0
      %1435 = vmatmul.mubr.f32.gmra.mrb[0].mxu0 %v1313
      %v1436 = vpop.f32.mrb[0].mxu0
      %v1437 = vadd.f32 %v1295, %v1436
      %v1438 = vpop.f32.mrb[0].mxu0
      %1439 = vmatprep.mubr.f32.mxu0 0.0
      %1440 = vmatmul.mubr.f32.gmra.mrb[0].mxu0 %v1316
      %v1441 = vpop.f32.mrb[0].mxu0
      %v1442 = vadd.f32 %v1295, %v1441
      %v1443 = vpop.f32.mrb[0].mxu0
      %1444 = vmatprep.mubr.f32.mxu0 0.0
      %1445 = vmatmul.mubr.f32.gmra.mrb[0].mxu0 %v1319
      %v1446 = vpop.f32.mrb[0].mxu0
      %v1447 = vadd.f32 %v1295, %v1446
      %v1448 = vpop.f32.mrb[0].mxu0
      %1449 = vmatprep.mubr.f32.mxu0 0.0
      %1450 = vmatmul.mubr.f32.gmra.mrb[0].mxu0 %v1322
      %v1451 = vpop.f32.mrb[0].mxu0
      %v1452 = vadd.f32 %v1295, %v1451
      %v1453 = vpop.f32.mrb[0].mxu0
      %1454 = vmatprep.mubr.f32.mxu0 0.0
      %1455 = vmatmul.mubr.f32.gmra.mrb[0].mxu0 %v1325
      %v1456 = vpop.f32.mrb[0].mxu0
      %v1457 = vadd.f32 %v1295, %v1456
      %v1458 = vpop.f32.mrb[0].mxu0
      %1459 = vmatprep.mubr.f32.mxu0 0.0
      %1460 = vmatmul.mubr.f32.gmra.mrb[0].mxu0 %v1328
      %v1461 = vpop.f32.mrb[0].mxu0
      %v1462 = vadd.f32 %v1295, %v1461
      %v1463 = vpop.f32.mrb[0].mxu0
      %1464 = vmatprep.mubr.f32.mxu0 0.0
      %1465 = vmatmul.mubr.f32.gmra.mrb[0].mxu0 %v1331
      %v1466 = vpop.f32.mrb[0].mxu0
      %v1467 = vadd.f32 %v1295, %v1466
      %v1468 = vpop.f32.mrb[0].mxu0
      %1469 = vmatprep.mubr.f32.mxu0 0.0
      %1470 = vmatmul.mubr.f32.gmra.mrb[0].mxu0 %v1334
      %v1471 = vpop.f32.mrb[0].mxu0
      %v1472 = vadd.f32 %v1295, %v1471
      %v1473 = vpop.f32.mrb[0].mxu0
      %1474 = vmatprep.mubr.f32.mxu0 0.0
      %1475 = vmatmul.mubr.f32.gmra.mrb[0].mxu0 %v1337
      %v1476 = vpop.f32.mrb[0].mxu0
      %v1477 = vadd.f32 %v1295, %v1476
      %v1478 = vpop.f32.mrb[0].mxu0
      %1479 = vmatprep.mubr.f32.mxu0 0.0
      %1480 = vmatmul.mubr.f32.gmra.mrb[0].mxu0 %v1340
      %v1481 = vpop.f32.mrb[0].mxu0
      %v1482 = vadd.f32 %v1295, %v1481
      %v1483 = vpop.f32.mrb[0].mxu0
      %1484 = vmatprep.mubr.f32.mxu0 0.0
      %1485 = vmatmul.mubr.f32.gmra.mrb[0].mxu0 %v1343
      %v1486 = vpop.f32.mrb[0].mxu0
      %v1487 = vadd.f32 %v1295, %v1486
      %v1488 = vpop.f32.mrb[0].mxu0
      %1489 = vdwg.mxu0
      %vm1490 = vcmask 64512
      %1491 = vst.msk [vmem:[%s388] sm:$0xff] %vm1490, %v1412
      %1492 = vst.msk [vmem:[%s388 + $0x8] sm:$0xff] %vm1490, %v1417
      %1493 = vst.msk [vmem:[%s388 + $0x10] sm:$0xff] %vm1490, %v1422
      %1494 = vst.msk [vmem:[%s388 + $0x18] sm:$0xff] %vm1490, %v1427
      %1495 = vst.msk [vmem:[%s388 + $0x20] sm:$0xff] %vm1490, %v1432
      %1496 = vst.msk [vmem:[%s388 + $0x28] sm:$0xff] %vm1490, %v1437
      %1497 = vst.msk [vmem:[%s388 + $0x30] sm:$0xff] %vm1490, %v1442
      %1498 = vst.msk [vmem:[%s388 + $0x38] sm:$0xff] %vm1490, %v1447
      %1499 = vst.msk [vmem:[%s388 + $0x40] sm:$0xff] %vm1490, %v1452
      %1500 = vst.msk [vmem:[%s388 + $0x48] sm:$0xff] %vm1490, %v1457
      %1501 = vst.msk [vmem:[%s388 + $0x50] sm:$0xff] %vm1490, %v1462
      %1502 = vst.msk [vmem:[%s388 + $0x58] sm:$0xff] %vm1490, %v1467
      %1503 = vst.msk [vmem:[%s388 + $0x60] sm:$0xff] %vm1490, %v1472
      %1504 = vst.msk [vmem:[%s388 + $0x68] sm:$0xff] %vm1490, %v1477
      %1505 = vst.msk [vmem:[%s388 + $0x70] sm:$0xff] %vm1490, %v1482
      %1506 = vst.msk [vmem:[%s388 + $0x78] sm:$0xff] %vm1490, %v1487
      %s1507 = smul.u32 16, %s22
      %p1508 = scmp.lt.s32.totalorder %s1507, 31
      %s1509 = scalar_select %p1508, %s1507, 31
      %s1510 = smul.addr %s1509, 8
      %s1511 = scalar_lea.vmem %s11, %s1510
      // Predicated region
      $region65: #{tpu_custom_call.1} parent=63 // pred_check
        %p1512 = pneg %p276
      $region66: #{tpu_custom_call.1} parent=63 // pred_check_branch
        %1514 = sbr.rel (%p1512) target = $region68
      $region67: #{tpu_custom_call.1} parent=63 // pred_region
        %s1515 = smul.u32 16, %s22
      $region68: #{tpu_custom_call.1} parent=63 // pred_fallthru
        _
    $region64: #{tpu_custom_call.1} parent=5 // pred_fallthru
      _
    %p1516 = scmp.le.s32.totalorder 2, %s17
    // Predicated region
    $region69: #{tpu_custom_call.1} parent=5 // pred_check
      %p1517 = pneg %p1516
    $region70: #{tpu_custom_call.1} parent=5 // pred_check_branch
      %1519 = sbr.rel (%p1517) target = $region72
    $region71: #{tpu_custom_call.1} parent=5 // pred_region
      %s1520 = ssub.s32 %s17, 2
      // Predicated region
      $region73: #{tpu_custom_call.1} parent=71 // pred_check
        %p1521 = pneg %p282
      $region74: #{tpu_custom_call.1} parent=71 // pred_check_branch
        %1523 = sbr.rel (%p1521) target = $region76
      $region75: #{tpu_custom_call.1} parent=71 // pred_region
        %s1524 = smul.u32 16, %s23
        %p1525 = scmp.lt.s32.totalorder %s1524, 31
        %s1526 = scalar_select %p1525, %s1524, 31
        %s1527 = smul.addr %s1526, 8
        %s1528 = scalar_lea.vmem %s11, %s1527
      $region76: #{tpu_custom_call.1} parent=71 // pred_fallthru
        _
    $region72: #{tpu_custom_call.1} parent=5 // pred_fallthru
      _
  $region6: #{tpu_custom_call.1} parent=0 // loop_footer
    %s21 = sadd.s32 1, %s17
  $region7: #{tpu_custom_call.1} parent=0 // loop_footer_branch
    %16 = sbr.rel target = $region3
  $region8: #{tpu_custom_call.1} parent=0 // loop_exit
    _

</llo_original>
